<compile_context>
chip_gen: v5e
topology: v5e:2x2
jax: 0.10.0
libtpu: 0.0.40
codegen_flags: <defaults>
</compile_context>

<pallas_src>
import jax
import jax.numpy as jnp
from jax import lax
from jax.experimental import pallas as pl
from jax.experimental.pallas import tpu as pltpu


def _round_up(x, m):
    return ((x + m - 1) // m) * m


def _choose_tile(n, max_tile, align, min_tiles=1):
    """Pick (tile, padded_n): tile aligned to `align`, ~<= max_tile, tile count
    chosen by cdiv so padding waste is < one tile."""
    n_al = _round_up(max(int(n), 1), align)
    n_tiles = max(int(min_tiles), -(-n_al // max(int(max_tile), align)))
    tile = _round_up(-(-n_al // n_tiles), align)
    padded = _round_up(n_al, tile)
    return tile, padded


def _vmem_limit_bytes():
    """Generation-aware scoped-VMEM limit: ~75% of per-core VMEM
    (v5e/v6e: 128 MiB -> 96 MiB, v7x: 64 MiB -> 48 MiB); 48 MiB fallback."""
    try:
        cap = int(pltpu.get_tpu_info().vmem_capacity_bytes)
    except Exception:
        cap = 64 * 1024 * 1024
    return int(min(cap * 3 // 4, 100 * 1024 * 1024))


# ----------------------------------------------------------------------------
# Kernel A: content feature MLP (fnn_in -> ReLU -> fnn_hi1 -> ReLU -> fnn_out)
# ----------------------------------------------------------------------------
def _fnn_kernel(x_ref, w1_ref, b1_ref, w2_ref, b2_ref, w3_ref, b3_ref, o_ref):
    # x / weights arrive bf16 (MXU-native); accumulate + elementwise in f32.
    h = jnp.dot(x_ref[...], w1_ref[...], preferred_element_type=jnp.float32)
    h = jnp.maximum(h + b1_ref[...], 0.0)                            # ReLU
    h = jnp.dot(h.astype(jnp.bfloat16), w2_ref[...],
                preferred_element_type=jnp.float32)
    h = jnp.maximum(h + b2_ref[...], 0.0)                            # ReLU
    o_ref[...] = (
        jnp.dot(h.astype(jnp.bfloat16), w3_ref[...],
                preferred_element_type=jnp.float32)
        + b3_ref[...]
    )


def fnn_forward(x, w1, b1, w2, b2, w3, b3, *, max_tile_rows=2048):
    n_rows, f_in = x.shape
    f_hid = w1.shape[1]
    n_emb = w3.shape[1]
    n_emb_p = _round_up(n_emb, 128)          # lane-dense output store

    tile_rows, padded_rows = _choose_tile(n_rows, max_tile_rows, 8)

    xb = x.astype(jnp.bfloat16)
    if padded_rows != n_rows:
        xb = jnp.pad(xb, ((0, padded_rows - n_rows), (0, 0)))

    w1b = w1.astype(jnp.bfloat16)
    w2b = w2.astype(jnp.bfloat16)
    w3b = jnp.pad(w3, ((0, 0), (0, n_emb_p - n_emb))).astype(jnp.bfloat16)
    b3p = jnp.pad(b3, ((0, 0), (0, n_emb_p - n_emb)))

    full = lambda t: (0, 0)
    out = pl.pallas_call(
        _fnn_kernel,
        out_shape=jax.ShapeDtypeStruct((padded_rows, n_emb_p), jnp.float32),
        grid_spec=pltpu.PrefetchScalarGridSpec(
            num_scalar_prefetch=0,
            grid=(padded_rows // tile_rows,),
            in_specs=[
                pl.BlockSpec((tile_rows, f_in), lambda t: (t, 0)),
                pl.BlockSpec((f_in, f_hid), full),
                pl.BlockSpec((1, f_hid), full),
                pl.BlockSpec((f_hid, f_hid), full),
                pl.BlockSpec((1, f_hid), full),
                pl.BlockSpec((f_hid, n_emb_p), full),
                pl.BlockSpec((1, n_emb_p), full),
            ],
            out_specs=pl.BlockSpec((tile_rows, n_emb_p), lambda t: (t, 0)),
        ),
        compiler_params=pltpu.CompilerParams(
            dimension_semantics=("parallel",),
            vmem_limit_bytes=_vmem_limit_bytes(),
        ),
    )(xb, w1b, b1, w2b, b2, w3b, b3p)
    return out[:n_rows, :n_emb]


# ----------------------------------------------------------------------------
# Kernel B: user x item interaction + deep-interaction MLP + sigmoid.
# Items live in the lane dimension; the user embedding is folded into the
# (tiny) first DI weight, eliminating the [T*I, E] intermediate entirely.
# ----------------------------------------------------------------------------
def _interaction_kernel(w_ref, ht_ref, a1_ref, c1_ref, a2_ref, c2_ref, wo_ref, o_ref):
    n_tile_users = w_ref.shape[0]

    ht = ht_ref[...]                       # [Ep, I]  bf16, items in lanes
    a1 = a1_ref[...]                       # [e2, Ep] f32 (scaled per user)
    a2 = a2_ref[...]                       # [e4, e2] bf16
    c1 = c1_ref[...]                       # [e2, 1]  f32
    c2 = c2_ref[...]                       # [e4, 1]  f32
    wo = wo_ref[...]                       # [e4, 1]  f32

    def user_step(t, carry):
        w_row = w_ref[pl.ds(t, 1), :]                                # [1, Ep] f32
        # (w * h) @ A1  ==  (A1^T * w_row) @ h^T  -- fold user into tiny weight.
        a1w = (a1 * w_row).astype(jnp.bfloat16)                      # [e2, Ep]
        z = jnp.dot(a1w, ht, preferred_element_type=jnp.float32)     # [e2, I]
        z = jnp.maximum(z + c1, 0.0)                                 # ReLU
        z = jnp.dot(a2, z.astype(jnp.bfloat16),
                    preferred_element_type=jnp.float32)              # [e4, I]
        z = jnp.maximum(z + c2, 0.0)                                 # ReLU
        # out_layer (Linear(e4,1,bias=False), weight init 1): weighted sublane sum.
        logits = jnp.sum(z * wo, axis=0, keepdims=True)              # [1, I] lane-major
        # sigmoid = 1/(1+exp(-x)): exp + approx reciprocal both on the EUP slot.
        o_ref[pl.ds(t, 1), :] = pl.reciprocal(1.0 + jnp.exp(-logits), approx=True)
        return carry

    unroll = 8 if (n_tile_users % 8 == 0) else 1
    lax.fori_loop(0, n_tile_users, user_step, 0, unroll=unroll)


def interaction_forward(w, h, a1, c1, a2, c2, wo, *,
                        max_tile_users=512, max_tile_items=2048):
    n_users, n_emb = w.shape
    n_items = h.shape[0]
    e2 = a1.shape[1]
    e4 = a2.shape[1]
    ep = _round_up(n_emb, 128)
    vmem_limit = _vmem_limit_bytes()

    # Item tile: lane dimension, multiple of 128, cdiv-chosen to bound padding.
    tile_items, padded_items = _choose_tile(n_items, max_tile_items, 128)
    n_item_tiles = padded_items // tile_items

    # User tile under a VMEM budget.  Per-step VMEM ~= double-buffered out/w/h
    # blocks + (unrolled) per-user matmul intermediates + resident weights.
    work_budget = int(vmem_limit * 0.6)
    fixed = (4 * ep * tile_items                              # ht bf16, double-buffered
             + 8 * (6 * e2 + 8 * e4 + 16) * tile_items        # per-user z1/z2/logits (x unroll)
             + 8 * (e2 * ep + e4 * e2) + 8 * (e2 + 2 * e4)    # resident weights/biases
             + (4 << 20))                                     # slack
    per_user_row = 8 * tile_items + 8 * ep                    # out f32 x2 + w f32 x2
    avail = max(work_budget - fixed, 64 * 1024)
    t_cap = max(8, avail // per_user_row)

    # Prefer >=2 grid steps along a parallel axis (v7x has 2 TensorCores/chip).
    min_user_tiles = 1 if n_item_tiles >= 2 else 2
    tile_users, padded_users = _choose_tile(
        n_users, min(max_tile_users, int(t_cap)), 8, min_tiles=min_user_tiles)

    # Pad embedding dim to Ep (zero columns contribute nothing) and lay out:
    #   w  : [users_p, Ep] f32 (scales the tiny a1 in f32 inside the kernel)
    #   h^T: [Ep, items_p] bf16 (matmul-only operand -> half the DMA bytes)
    wp = jnp.pad(w, ((0, padded_users - n_users), (0, ep - n_emb)))
    hp = jnp.pad(h, ((0, padded_items - n_items), (0, ep - n_emb)))
    ht = hp.astype(jnp.bfloat16).T                            # [Ep, items_p]

    a1t = jnp.pad(a1.T, ((0, 0), (0, ep - n_emb)))            # [e2, Ep] f32
    a2t = a2.T.astype(jnp.bfloat16)                           # [e4, e2]
    c1t = c1.reshape(e2, 1)                                   # biases along sublanes
    c2t = c2.reshape(e4, 1)
    wot = wo.reshape(e4, 1)

    full2 = lambda tu, ti: (0, 0)
    out = pl.pallas_call(
        _interaction_kernel,
        out_shape=jax.ShapeDtypeStruct((padded_users, padded_items), jnp.float32),
        grid_spec=pltpu.PrefetchScalarGridSpec(
            num_scalar_prefetch=0,
            grid=(padded_users // tile_users, n_item_tiles),
            in_specs=[
                pl.BlockSpec((tile_users, ep), lambda tu, ti: (tu, 0)),
                pl.BlockSpec((ep, tile_items), lambda tu, ti: (0, ti)),
                pl.BlockSpec((e2, ep), full2),
                pl.BlockSpec((e2, 1), full2),
                pl.BlockSpec((e4, e2), full2),
                pl.BlockSpec((e4, 1), full2),
                pl.BlockSpec((e4, 1), full2),
            ],
            out_specs=pl.BlockSpec((tile_users, tile_items), lambda tu, ti: (tu, ti)),
        ),
        compiler_params=pltpu.CompilerParams(
            dimension_semantics=("parallel", "parallel"),
            vmem_limit_bytes=vmem_limit,
        ),
    )(wp, ht, a1t, c1t, a2t, c2t, wot)
    return out[:n_users, :n_items]


# ----------------------------------------------------------------------------
# Parameters (deterministic, matching the PyTorch module's shapes)
# ----------------------------------------------------------------------------
def init_params(
    key, n_users, n_songs, n_features_in, n_features_hidden, n_embeddings, n_layers_di=2
):
    ks = jax.random.split(key, 6 + n_layers_di)

    def linear(k, fan_in, fan_out):
        bound = 1.0 / float(fan_in) ** 0.5
        kw, kb = jax.random.split(k)
        w = jax.random.uniform(kw, (fan_in, fan_out), jnp.float32, -bound, bound)
        b = jax.random.uniform(kb, (1, fan_out), jnp.float32, -bound, bound)
        return w, b

    params = {
        "user_emb": 0.01 * jax.random.normal(ks[0], (n_users, n_embeddings), jnp.float32),
        "item_emb": 0.01 * jax.random.normal(ks[1], (n_songs, n_embeddings), jnp.float32),
        "fnn_in": linear(ks[2], n_features_in, n_features_hidden),
        "fnn_hi1": linear(ks[3], n_features_hidden, n_features_hidden),
        "fnn_out": linear(ks[4], n_features_hidden, n_embeddings),
    }
    # deep-interaction layers; inter='mult' => n_features_di_in = n_embeddings
    f_di_in = n_embeddings
    params["di"] = [
        linear(ks[5 + q], f_di_in // 2**q, f_di_in // 2 ** (q + 1))
        for q in range(n_layers_di)
    ]
    # out_layer: Linear(f_di_in // 2**n_layers_di, 1, bias=False), weight filled with 1
    params["out_w"] = jnp.ones((1, f_di_in // 2**n_layers_di), jnp.float32)
    return params


# ----------------------------------------------------------------------------
# Full forward (mirrors ModelNCACF.forward, default configuration, jittable)
# ----------------------------------------------------------------------------
def model_ncacf_forward(params, u, x, i, *, use_item_emb=True,
                        inter="mult", n_layers_di=2):
    # TODO(synk): inter='conc' concat path and n_layers_di in {-1, 0} are not wired
    #             into the Pallas kernels; default config (mult / 2 layers) only.
    assert inter == "mult" and n_layers_di == 2

    w = params["user_emb"][u]                         # Embedding lookup (glue gather)

    w1, b1 = params["fnn_in"]
    w2, b2 = params["fnn_hi1"]
    w3, b3 = params["fnn_out"]
    h_con = fnn_forward(x, w1, b1, w2, b2, w3, b3)    # Pallas kernel A

    # Static selection (variant=='strict' or all(i == -1)) is decided on host,
    # outside jit -> no device->host sync between kernel A and kernel B.
    h = params["item_emb"][i] if use_item_emb else h_con

    (a1, c1), (a2, c2) = params["di"]
    pred_rat = interaction_forward(w, h, a1, c1, a2, c2, params["out_w"])  # kernel B
    return pred_rat, w, h, h_con


# ----------------------------------------------------------------------------
# Pure-JAX f32 reference (for sanity checking the kernels)
# ----------------------------------------------------------------------------
def reference_forward(params, u, x, i, *, variant="relaxed"):
    w = params["user_emb"][u]
    w1, b1 = params["fnn_in"]
    w2, b2 = params["fnn_hi1"]
    w3, b3 = params["fnn_out"]
    h_con = jnp.maximum(x @ w1 + b1, 0.0)
    h_con = jnp.maximum(h_con @ w2 + b2, 0.0)
    h_con = h_con @ w3 + b3
    if bool(jnp.all(i == -1)) or variant == "strict":
        h = h_con
    else:
        h = params["item_emb"][i]
    emb = (w[:, None, :] * h[None, :, :]).reshape(-1, w.shape[-1])
    (a1, c1), (a2, c2) = params["di"]
    z = jnp.maximum(emb @ a1 + c1, 0.0)
    z = jnp.maximum(z @ a2 + c2, 0.0)
    pred = jax.nn.sigmoid(z @ params["out_w"].T).reshape(w.shape[0], -1)
    return pred, w, h, h_con


if __name__ == "__main__":
    # Small shapes consistent with the module.
    n_users, n_songs = 16, 32
    n_features_in, n_features_hidden, n_embeddings = 16, 32, 32

    key = jax.random.PRNGKey(0)
    kp, kx = jax.random.split(key)
    params = init_params(
        kp, n_users, n_songs, n_features_in, n_features_hidden, n_embeddings
    )

    u = jnp.arange(n_users, dtype=jnp.int32)                 # all users
    i = jnp.arange(n_songs, dtype=jnp.int32)                 # item batch (not all -1)
    x = jax.random.normal(kx, (n_songs, n_features_in), jnp.float32)

    variant = "relaxed"
    # Decide h-source once on host, before jit (replaces in-graph bool() sync).
    use_item_emb = (variant != "strict") and (not bool(jnp.all(i == -1)))

    fwd = jax.jit(model_ncacf_forward, static_argnames=("use_item_emb",))
    pred_rat, w, h, h_con = fwd(params, u, x, i, use_item_emb=use_item_emb)
    jax.block_until_ready((pred_rat, w, h, h_con))

    # Sanity check against pure-JAX f32 reference (kernels use bf16 matmul inputs
    # plus an EUP approx-reciprocal sigmoid, hence the loose tolerances).
    ref_pred, ref_w, ref_h, ref_hcon = reference_forward(params, u, x, i, variant=variant)
    assert pred_rat.shape == (n_users, n_songs)
    assert h_con.shape == (n_songs, n_embeddings)
    assert jnp.allclose(h_con, ref_hcon, atol=3e-2, rtol=3e-2)
    assert jnp.allclose(pred_rat, ref_pred, atol=2e-2, rtol=2e-2)
    if use_item_emb:
        assert jnp.allclose(h, ref_h)

    print("KERNEL_OK")
</pallas_src>

<mosaic_0001>
module attributes {stable_mosaic.version = 11 : i64} {
  func.func @_interaction_kernel(%arg0: i32, %arg1: i32, %arg2: memref<8x128xf32, #tpu.memory_space<vmem>>, %arg3: memref<128x128xbf16, #tpu.memory_space<vmem>>, %arg4: memref<16x128xf32, #tpu.memory_space<vmem>>, %arg5: memref<16x1xf32, #tpu.memory_space<vmem>>, %arg6: memref<8x16xbf16, #tpu.memory_space<vmem>>, %arg7: memref<8x1xf32, #tpu.memory_space<vmem>>, %arg8: memref<8x1xf32, #tpu.memory_space<vmem>>, %arg9: memref<8x128xf32, #tpu.memory_space<vmem>>) attributes {dimension_semantics = [#tpu.dimension_semantics<parallel>, #tpu.dimension_semantics<parallel>], iteration_bounds = array<i64: 2, 1>, scalar_prefetch = 0 : i64, scratch_operands = 0 : i64, tpu.core_type = #tpu.core_type<tc>, window_params = [{transform_indices = @transform_0, window_bounds = array<i64: 8, 128>}, {transform_indices = @transform_1, window_bounds = array<i64: 128, 128>}, {pipeline_mode = #tpu.pipeline_mode<synchronous>, transform_indices = @transform_2, window_bounds = array<i64: 16, 128>}, {pipeline_mode = #tpu.pipeline_mode<synchronous>, transform_indices = @transform_3, window_bounds = array<i64: 16, 1>}, {pipeline_mode = #tpu.pipeline_mode<synchronous>, transform_indices = @transform_4, window_bounds = array<i64: 8, 16>}, {pipeline_mode = #tpu.pipeline_mode<synchronous>, transform_indices = @transform_5, window_bounds = array<i64: 8, 1>}, {pipeline_mode = #tpu.pipeline_mode<synchronous>, transform_indices = @transform_6, window_bounds = array<i64: 8, 1>}, {transform_indices = @transform_7, window_bounds = array<i64: 8, 128>}]} {
    %c0 = arith.constant 0 : index
    %c0_0 = arith.constant 0 : index
    %0 = vector.load %arg3[%c0, %c0_0] : memref<128x128xbf16, #tpu.memory_space<vmem>>, vector<128x128xbf16>
    %c0_1 = arith.constant 0 : index
    %c0_2 = arith.constant 0 : index
    %1 = vector.load %arg4[%c0_1, %c0_2] : memref<16x128xf32, #tpu.memory_space<vmem>>, vector<16x128xf32>
    %c0_3 = arith.constant 0 : index
    %c0_4 = arith.constant 0 : index
    %2 = vector.load %arg6[%c0_3, %c0_4] : memref<8x16xbf16, #tpu.memory_space<vmem>>, vector<8x16xbf16>
    %c0_5 = arith.constant 0 : index
    %c0_6 = arith.constant 0 : index
    %3 = vector.load %arg5[%c0_5, %c0_6] : memref<16x1xf32, #tpu.memory_space<vmem>>, vector<16x1xf32>
    %c0_7 = arith.constant 0 : index
    %c0_8 = arith.constant 0 : index
    %4 = vector.load %arg7[%c0_7, %c0_8] : memref<8x1xf32, #tpu.memory_space<vmem>>, vector<8x1xf32>
    %c0_9 = arith.constant 0 : index
    %c0_10 = arith.constant 0 : index
    %5 = vector.load %arg8[%c0_9, %c0_10] : memref<8x1xf32, #tpu.memory_space<vmem>>, vector<8x1xf32>
    %c0_i32 = arith.constant 0 : i32
    %6 = arith.index_cast %c0_i32 : i32 to index
    %c0_11 = arith.constant 0 : index
    %7 = vector.load %arg2[%6, %c0_11] : memref<8x128xf32, #tpu.memory_space<vmem>>, vector<1x128xf32>
    %8 = vector.broadcast %7 : vector<1x128xf32> to vector<16x128xf32>
    %9 = arith.mulf %1, %8 : vector<16x128xf32>
    %10 = arith.truncf %9 : vector<16x128xf32> to vector<16x128xbf16>
    %cst = arith.constant dense<0.000000e+00> : vector<16x128xf32>
    %11 = tpu.matmul %10, %0, %cst {dimension_numbers = #tpu.dot_dimension_numbers<[1], [0], [0], [1], [0, 0, 1, 1], [], []>} : vector<16x128xbf16>, vector<128x128xbf16>, vector<16x128xf32> -> vector<16x128xf32>
    %12 = vector.broadcast %3 : vector<16x1xf32> to vector<16x128xf32>
    %13 = arith.addf %11, %12 : vector<16x128xf32>
    %cst_12 = arith.constant 0.000000e+00 : f32
    %14 = vector.broadcast %cst_12 : f32 to vector<16x128xf32>
    %15 = arith.maximumf %13, %14 : vector<16x128xf32>
    %16 = arith.truncf %15 : vector<16x128xf32> to vector<16x128xbf16>
    %cst_13 = arith.constant dense<0.000000e+00> : vector<8x128xf32>
    %17 = tpu.matmul %2, %16, %cst_13 {dimension_numbers = #tpu.dot_dimension_numbers<[1], [0], [0], [1], [0, 0, 1, 1], [], []>} : vector<8x16xbf16>, vector<16x128xbf16>, vector<8x128xf32> -> vector<8x128xf32>
    %18 = vector.broadcast %4 : vector<8x1xf32> to vector<8x128xf32>
    %19 = arith.addf %17, %18 : vector<8x128xf32>
    %cst_14 = arith.constant 0.000000e+00 : f32
    %20 = vector.broadcast %cst_14 : f32 to vector<8x128xf32>
    %21 = arith.maximumf %19, %20 : vector<8x128xf32>
    %22 = vector.broadcast %5 : vector<8x1xf32> to vector<8x128xf32>
    %23 = arith.mulf %21, %22 : vector<8x128xf32>
    %cst_15 = arith.constant dense<0.000000e+00> : vector<128xf32>
    %24 = vector.multi_reduction <add>, %23, %cst_15 [0] : vector<8x128xf32> to vector<128xf32>
    %25 = vector.shape_cast %24 : vector<128xf32> to vector<1x128xf32>
    %cst_16 = arith.constant 0.000000e+00 : f32
    %26 = vector.broadcast %cst_16 : f32 to vector<1x128xf32>
    %27 = arith.subf %26, %25 : vector<1x128xf32>
    %28 = math.exp %27 : vector<1x128xf32>
    %cst_17 = arith.constant 1.000000e+00 : f32
    %29 = vector.broadcast %cst_17 : f32 to vector<1x128xf32>
    %30 = arith.addf %29, %28 : vector<1x128xf32>
    %31 = tpu.reciprocal %30 {approx = true} : vector<1x128xf32> -> vector<1x128xf32>
    %32 = arith.index_cast %c0_i32 : i32 to index
    %c0_18 = arith.constant 0 : index
    %33 = vector.load %arg9[%32, %c0_18] : memref<8x128xf32, #tpu.memory_space<vmem>>, vector<1x128xf32>
    tpu.vector_store %arg9[%32, %c0_18], %31 {strides = array<i32>} : memref<8x128xf32, #tpu.memory_space<vmem>>, vector<1x128xf32>,
    %c1_i32 = arith.constant 1 : i32
    %34 = arith.index_cast %c1_i32 : i32 to index
    %c0_19 = arith.constant 0 : index
    %35 = vector.load %arg2[%34, %c0_19] : memref<8x128xf32, #tpu.memory_space<vmem>>, vector<1x128xf32>
    %36 = vector.broadcast %35 : vector<1x128xf32> to vector<16x128xf32>
    %37 = arith.mulf %1, %36 : vector<16x128xf32>
    %38 = arith.truncf %37 : vector<16x128xf32> to vector<16x128xbf16>
    %cst_20 = arith.constant dense<0.000000e+00> : vector<16x128xf32>
    %39 = tpu.matmul %38, %0, %cst_20 {dimension_numbers = #tpu.dot_dimension_numbers<[1], [0], [0], [1], [0, 0, 1, 1], [], []>} : vector<16x128xbf16>, vector<128x128xbf16>, vector<16x128xf32> -> vector<16x128xf32>
    %40 = vector.broadcast %3 : vector<16x1xf32> to vector<16x128xf32>
    %41 = arith.addf %39, %40 : vector<16x128xf32>
    %cst_21 = arith.constant 0.000000e+00 : f32
    %42 = vector.broadcast %cst_21 : f32 to vector<16x128xf32>
    %43 = arith.maximumf %41, %42 : vector<16x128xf32>
    %44 = arith.truncf %43 : vector<16x128xf32> to vector<16x128xbf16>
    %cst_22 = arith.constant dense<0.000000e+00> : vector<8x128xf32>
    %45 = tpu.matmul %2, %44, %cst_22 {dimension_numbers = #tpu.dot_dimension_numbers<[1], [0], [0], [1], [0, 0, 1, 1], [], []>} : vector<8x16xbf16>, vector<16x128xbf16>, vector<8x128xf32> -> vector<8x128xf32>
    %46 = vector.broadcast %4 : vector<8x1xf32> to vector<8x128xf32>
    %47 = arith.addf %45, %46 : vector<8x128xf32>
    %cst_23 = arith.constant 0.000000e+00 : f32
    %48 = vector.broadcast %cst_23 : f32 to vector<8x128xf32>
    %49 = arith.maximumf %47, %48 : vector<8x128xf32>
    %50 = vector.broadcast %5 : vector<8x1xf32> to vector<8x128xf32>
    %51 = arith.mulf %49, %50 : vector<8x128xf32>
    %cst_24 = arith.constant dense<0.000000e+00> : vector<128xf32>
    %52 = vector.multi_reduction <add>, %51, %cst_24 [0] : vector<8x128xf32> to vector<128xf32>
    %53 = vector.shape_cast %52 : vector<128xf32> to vector<1x128xf32>
    %cst_25 = arith.constant 0.000000e+00 : f32
    %54 = vector.broadcast %cst_25 : f32 to vector<1x128xf32>
    %55 = arith.subf %54, %53 : vector<1x128xf32>
    %56 = math.exp %55 : vector<1x128xf32>
    %cst_26 = arith.constant 1.000000e+00 : f32
    %57 = vector.broadcast %cst_26 : f32 to vector<1x128xf32>
    %58 = arith.addf %57, %56 : vector<1x128xf32>
    %59 = tpu.reciprocal %58 {approx = true} : vector<1x128xf32> -> vector<1x128xf32>
    %60 = arith.index_cast %c1_i32 : i32 to index
    %c0_27 = arith.constant 0 : index
    %61 = vector.load %arg9[%60, %c0_27] : memref<8x128xf32, #tpu.memory_space<vmem>>, vector<1x128xf32>
    tpu.vector_store %arg9[%60, %c0_27], %59 {strides = array<i32>} : memref<8x128xf32, #tpu.memory_space<vmem>>, vector<1x128xf32>,
    %c2_i32 = arith.constant 2 : i32
    %62 = arith.index_cast %c2_i32 : i32 to index
    %c0_28 = arith.constant 0 : index
    %63 = vector.load %arg2[%62, %c0_28] : memref<8x128xf32, #tpu.memory_space<vmem>>, vector<1x128xf32>
    %64 = vector.broadcast %63 : vector<1x128xf32> to vector<16x128xf32>
    %65 = arith.mulf %1, %64 : vector<16x128xf32>
    %66 = arith.truncf %65 : vector<16x128xf32> to vector<16x128xbf16>
    %cst_29 = arith.constant dense<0.000000e+00> : vector<16x128xf32>
    %67 = tpu.matmul %66, %0, %cst_29 {dimension_numbers = #tpu.dot_dimension_numbers<[1], [0], [0], [1], [0, 0, 1, 1], [], []>} : vector<16x128xbf16>, vector<128x128xbf16>, vector<16x128xf32> -> vector<16x128xf32>
    %68 = vector.broadcast %3 : vector<16x1xf32> to vector<16x128xf32>
    %69 = arith.addf %67, %68 : vector<16x128xf32>
    %cst_30 = arith.constant 0.000000e+00 : f32
    %70 = vector.broadcast %cst_30 : f32 to vector<16x128xf32>
    %71 = arith.maximumf %69, %70 : vector<16x128xf32>
    %72 = arith.truncf %71 : vector<16x128xf32> to vector<16x128xbf16>
    %cst_31 = arith.constant dense<0.000000e+00> : vector<8x128xf32>
    %73 = tpu.matmul %2, %72, %cst_31 {dimension_numbers = #tpu.dot_dimension_numbers<[1], [0], [0], [1], [0, 0, 1, 1], [], []>} : vector<8x16xbf16>, vector<16x128xbf16>, vector<8x128xf32> -> vector<8x128xf32>
    %74 = vector.broadcast %4 : vector<8x1xf32> to vector<8x128xf32>
    %75 = arith.addf %73, %74 : vector<8x128xf32>
    %cst_32 = arith.constant 0.000000e+00 : f32
    %76 = vector.broadcast %cst_32 : f32 to vector<8x128xf32>
    %77 = arith.maximumf %75, %76 : vector<8x128xf32>
    %78 = vector.broadcast %5 : vector<8x1xf32> to vector<8x128xf32>
    %79 = arith.mulf %77, %78 : vector<8x128xf32>
    %cst_33 = arith.constant dense<0.000000e+00> : vector<128xf32>
    %80 = vector.multi_reduction <add>, %79, %cst_33 [0] : vector<8x128xf32> to vector<128xf32>
    %81 = vector.shape_cast %80 : vector<128xf32> to vector<1x128xf32>
    %cst_34 = arith.constant 0.000000e+00 : f32
    %82 = vector.broadcast %cst_34 : f32 to vector<1x128xf32>
    %83 = arith.subf %82, %81 : vector<1x128xf32>
    %84 = math.exp %83 : vector<1x128xf32>
    %cst_35 = arith.constant 1.000000e+00 : f32
    %85 = vector.broadcast %cst_35 : f32 to vector<1x128xf32>
    %86 = arith.addf %85, %84 : vector<1x128xf32>
    %87 = tpu.reciprocal %86 {approx = true} : vector<1x128xf32> -> vector<1x128xf32>
    %88 = arith.index_cast %c2_i32 : i32 to index
    %c0_36 = arith.constant 0 : index
    %89 = vector.load %arg9[%88, %c0_36] : memref<8x128xf32, #tpu.memory_space<vmem>>, vector<1x128xf32>
    tpu.vector_store %arg9[%88, %c0_36], %87 {strides = array<i32>} : memref<8x128xf32, #tpu.memory_space<vmem>>, vector<1x128xf32>,
    %c3_i32 = arith.constant 3 : i32
    %90 = arith.index_cast %c3_i32 : i32 to index
    %c0_37 = arith.constant 0 : index
    %91 = vector.load %arg2[%90, %c0_37] : memref<8x128xf32, #tpu.memory_space<vmem>>, vector<1x128xf32>
    %92 = vector.broadcast %91 : vector<1x128xf32> to vector<16x128xf32>
    %93 = arith.mulf %1, %92 : vector<16x128xf32>
    %94 = arith.truncf %93 : vector<16x128xf32> to vector<16x128xbf16>
    %cst_38 = arith.constant dense<0.000000e+00> : vector<16x128xf32>
    %95 = tpu.matmul %94, %0, %cst_38 {dimension_numbers = #tpu.dot_dimension_numbers<[1], [0], [0], [1], [0, 0, 1, 1], [], []>} : vector<16x128xbf16>, vector<128x128xbf16>, vector<16x128xf32> -> vector<16x128xf32>
    %96 = vector.broadcast %3 : vector<16x1xf32> to vector<16x128xf32>
    %97 = arith.addf %95, %96 : vector<16x128xf32>
    %cst_39 = arith.constant 0.000000e+00 : f32
    %98 = vector.broadcast %cst_39 : f32 to vector<16x128xf32>
    %99 = arith.maximumf %97, %98 : vector<16x128xf32>
    %100 = arith.truncf %99 : vector<16x128xf32> to vector<16x128xbf16>
    %cst_40 = arith.constant dense<0.000000e+00> : vector<8x128xf32>
    %101 = tpu.matmul %2, %100, %cst_40 {dimension_numbers = #tpu.dot_dimension_numbers<[1], [0], [0], [1], [0, 0, 1, 1], [], []>} : vector<8x16xbf16>, vector<16x128xbf16>, vector<8x128xf32> -> vector<8x128xf32>
    %102 = vector.broadcast %4 : vector<8x1xf32> to vector<8x128xf32>
    %103 = arith.addf %101, %102 : vector<8x128xf32>
    %cst_41 = arith.constant 0.000000e+00 : f32
    %104 = vector.broadcast %cst_41 : f32 to vector<8x128xf32>
    %105 = arith.maximumf %103, %104 : vector<8x128xf32>
    %106 = vector.broadcast %5 : vector<8x1xf32> to vector<8x128xf32>
    %107 = arith.mulf %105, %106 : vector<8x128xf32>
    %cst_42 = arith.constant dense<0.000000e+00> : vector<128xf32>
    %108 = vector.multi_reduction <add>, %107, %cst_42 [0] : vector<8x128xf32> to vector<128xf32>
    %109 = vector.shape_cast %108 : vector<128xf32> to vector<1x128xf32>
    %cst_43 = arith.constant 0.000000e+00 : f32
    %110 = vector.broadcast %cst_43 : f32 to vector<1x128xf32>
    %111 = arith.subf %110, %109 : vector<1x128xf32>
    %112 = math.exp %111 : vector<1x128xf32>
    %cst_44 = arith.constant 1.000000e+00 : f32
    %113 = vector.broadcast %cst_44 : f32 to vector<1x128xf32>
    %114 = arith.addf %113, %112 : vector<1x128xf32>
    %115 = tpu.reciprocal %114 {approx = true} : vector<1x128xf32> -> vector<1x128xf32>
    %116 = arith.index_cast %c3_i32 : i32 to index
    %c0_45 = arith.constant 0 : index
    %117 = vector.load %arg9[%116, %c0_45] : memref<8x128xf32, #tpu.memory_space<vmem>>, vector<1x128xf32>
    tpu.vector_store %arg9[%116, %c0_45], %115 {strides = array<i32>} : memref<8x128xf32, #tpu.memory_space<vmem>>, vector<1x128xf32>,
    %c4_i32 = arith.constant 4 : i32
    %118 = arith.index_cast %c4_i32 : i32 to index
    %c0_46 = arith.constant 0 : index
    %119 = vector.load %arg2[%118, %c0_46] : memref<8x128xf32, #tpu.memory_space<vmem>>, vector<1x128xf32>
    %120 = vector.broadcast %119 : vector<1x128xf32> to vector<16x128xf32>
    %121 = arith.mulf %1, %120 : vector<16x128xf32>
    %122 = arith.truncf %121 : vector<16x128xf32> to vector<16x128xbf16>
    %cst_47 = arith.constant dense<0.000000e+00> : vector<16x128xf32>
    %123 = tpu.matmul %122, %0, %cst_47 {dimension_numbers = #tpu.dot_dimension_numbers<[1], [0], [0], [1], [0, 0, 1, 1], [], []>} : vector<16x128xbf16>, vector<128x128xbf16>, vector<16x128xf32> -> vector<16x128xf32>
    %124 = vector.broadcast %3 : vector<16x1xf32> to vector<16x128xf32>
    %125 = arith.addf %123, %124 : vector<16x128xf32>
    %cst_48 = arith.constant 0.000000e+00 : f32
    %126 = vector.broadcast %cst_48 : f32 to vector<16x128xf32>
    %127 = arith.maximumf %125, %126 : vector<16x128xf32>
    %128 = arith.truncf %127 : vector<16x128xf32> to vector<16x128xbf16>
    %cst_49 = arith.constant dense<0.000000e+00> : vector<8x128xf32>
    %129 = tpu.matmul %2, %128, %cst_49 {dimension_numbers = #tpu.dot_dimension_numbers<[1], [0], [0], [1], [0, 0, 1, 1], [], []>} : vector<8x16xbf16>, vector<16x128xbf16>, vector<8x128xf32> -> vector<8x128xf32>
    %130 = vector.broadcast %4 : vector<8x1xf32> to vector<8x128xf32>
    %131 = arith.addf %129, %130 : vector<8x128xf32>
    %cst_50 = arith.constant 0.000000e+00 : f32
    %132 = vector.broadcast %cst_50 : f32 to vector<8x128xf32>
    %133 = arith.maximumf %131, %132 : vector<8x128xf32>
    %134 = vector.broadcast %5 : vector<8x1xf32> to vector<8x128xf32>
    %135 = arith.mulf %133, %134 : vector<8x128xf32>
    %cst_51 = arith.constant dense<0.000000e+00> : vector<128xf32>
    %136 = vector.multi_reduction <add>, %135, %cst_51 [0] : vector<8x128xf32> to vector<128xf32>
    %137 = vector.shape_cast %136 : vector<128xf32> to vector<1x128xf32>
    %cst_52 = arith.constant 0.000000e+00 : f32
    %138 = vector.broadcast %cst_52 : f32 to vector<1x128xf32>
    %139 = arith.subf %138, %137 : vector<1x128xf32>
    %140 = math.exp %139 : vector<1x128xf32>
    %cst_53 = arith.constant 1.000000e+00 : f32
    %141 = vector.broadcast %cst_53 : f32 to vector<1x128xf32>
    %142 = arith.addf %141, %140 : vector<1x128xf32>
    %143 = tpu.reciprocal %142 {approx = true} : vector<1x128xf32> -> vector<1x128xf32>
    %144 = arith.index_cast %c4_i32 : i32 to index
    %c0_54 = arith.constant 0 : index
    %145 = vector.load %arg9[%144, %c0_54] : memref<8x128xf32, #tpu.memory_space<vmem>>, vector<1x128xf32>
    tpu.vector_store %arg9[%144, %c0_54], %143 {strides = array<i32>} : memref<8x128xf32, #tpu.memory_space<vmem>>, vector<1x128xf32>,
    %c5_i32 = arith.constant 5 : i32
    %146 = arith.index_cast %c5_i32 : i32 to index
    %c0_55 = arith.constant 0 : index
    %147 = vector.load %arg2[%146, %c0_55] : memref<8x128xf32, #tpu.memory_space<vmem>>, vector<1x128xf32>
    %148 = vector.broadcast %147 : vector<1x128xf32> to vector<16x128xf32>
    %149 = arith.mulf %1, %148 : vector<16x128xf32>
    %150 = arith.truncf %149 : vector<16x128xf32> to vector<16x128xbf16>
    %cst_56 = arith.constant dense<0.000000e+00> : vector<16x128xf32>
    %151 = tpu.matmul %150, %0, %cst_56 {dimension_numbers = #tpu.dot_dimension_numbers<[1], [0], [0], [1], [0, 0, 1, 1], [], []>} : vector<16x128xbf16>, vector<128x128xbf16>, vector<16x128xf32> -> vector<16x128xf32>
    %152 = vector.broadcast %3 : vector<16x1xf32> to vector<16x128xf32>
    %153 = arith.addf %151, %152 : vector<16x128xf32>
    %cst_57 = arith.constant 0.000000e+00 : f32
    %154 = vector.broadcast %cst_57 : f32 to vector<16x128xf32>
    %155 = arith.maximumf %153, %154 : vector<16x128xf32>
    %156 = arith.truncf %155 : vector<16x128xf32> to vector<16x128xbf16>
    %cst_58 = arith.constant dense<0.000000e+00> : vector<8x128xf32>
    %157 = tpu.matmul %2, %156, %cst_58 {dimension_numbers = #tpu.dot_dimension_numbers<[1], [0], [0], [1], [0, 0, 1, 1], [], []>} : vector<8x16xbf16>, vector<16x128xbf16>, vector<8x128xf32> -> vector<8x128xf32>
    %158 = vector.broadcast %4 : vector<8x1xf32> to vector<8x128xf32>
    %159 = arith.addf %157, %158 : vector<8x128xf32>
    %cst_59 = arith.constant 0.000000e+00 : f32
    %160 = vector.broadcast %cst_59 : f32 to vector<8x128xf32>
    %161 = arith.maximumf %159, %160 : vector<8x128xf32>
    %162 = vector.broadcast %5 : vector<8x1xf32> to vector<8x128xf32>
    %163 = arith.mulf %161, %162 : vector<8x128xf32>
    %cst_60 = arith.constant dense<0.000000e+00> : vector<128xf32>
    %164 = vector.multi_reduction <add>, %163, %cst_60 [0] : vector<8x128xf32> to vector<128xf32>
    %165 = vector.shape_cast %164 : vector<128xf32> to vector<1x128xf32>
    %cst_61 = arith.constant 0.000000e+00 : f32
    %166 = vector.broadcast %cst_61 : f32 to vector<1x128xf32>
    %167 = arith.subf %166, %165 : vector<1x128xf32>
    %168 = math.exp %167 : vector<1x128xf32>
    %cst_62 = arith.constant 1.000000e+00 : f32
    %169 = vector.broadcast %cst_62 : f32 to vector<1x128xf32>
    %170 = arith.addf %169, %168 : vector<1x128xf32>
    %171 = tpu.reciprocal %170 {approx = true} : vector<1x128xf32> -> vector<1x128xf32>
    %172 = arith.index_cast %c5_i32 : i32 to index
    %c0_63 = arith.constant 0 : index
    %173 = vector.load %arg9[%172, %c0_63] : memref<8x128xf32, #tpu.memory_space<vmem>>, vector<1x128xf32>
    tpu.vector_store %arg9[%172, %c0_63], %171 {strides = array<i32>} : memref<8x128xf32, #tpu.memory_space<vmem>>, vector<1x128xf32>,
    %c6_i32 = arith.constant 6 : i32
    %174 = arith.index_cast %c6_i32 : i32 to index
    %c0_64 = arith.constant 0 : index
    %175 = vector.load %arg2[%174, %c0_64] : memref<8x128xf32, #tpu.memory_space<vmem>>, vector<1x128xf32>
    %176 = vector.broadcast %175 : vector<1x128xf32> to vector<16x128xf32>
    %177 = arith.mulf %1, %176 : vector<16x128xf32>
    %178 = arith.truncf %177 : vector<16x128xf32> to vector<16x128xbf16>
    %cst_65 = arith.constant dense<0.000000e+00> : vector<16x128xf32>
    %179 = tpu.matmul %178, %0, %cst_65 {dimension_numbers = #tpu.dot_dimension_numbers<[1], [0], [0], [1], [0, 0, 1, 1], [], []>} : vector<16x128xbf16>, vector<128x128xbf16>, vector<16x128xf32> -> vector<16x128xf32>
    %180 = vector.broadcast %3 : vector<16x1xf32> to vector<16x128xf32>
    %181 = arith.addf %179, %180 : vector<16x128xf32>
    %cst_66 = arith.constant 0.000000e+00 : f32
    %182 = vector.broadcast %cst_66 : f32 to vector<16x128xf32>
    %183 = arith.maximumf %181, %182 : vector<16x128xf32>
    %184 = arith.truncf %183 : vector<16x128xf32> to vector<16x128xbf16>
    %cst_67 = arith.constant dense<0.000000e+00> : vector<8x128xf32>
    %185 = tpu.matmul %2, %184, %cst_67 {dimension_numbers = #tpu.dot_dimension_numbers<[1], [0], [0], [1], [0, 0, 1, 1], [], []>} : vector<8x16xbf16>, vector<16x128xbf16>, vector<8x128xf32> -> vector<8x128xf32>
    %186 = vector.broadcast %4 : vector<8x1xf32> to vector<8x128xf32>
    %187 = arith.addf %185, %186 : vector<8x128xf32>
    %cst_68 = arith.constant 0.000000e+00 : f32
    %188 = vector.broadcast %cst_68 : f32 to vector<8x128xf32>
    %189 = arith.maximumf %187, %188 : vector<8x128xf32>
    %190 = vector.broadcast %5 : vector<8x1xf32> to vector<8x128xf32>
    %191 = arith.mulf %189, %190 : vector<8x128xf32>
    %cst_69 = arith.constant dense<0.000000e+00> : vector<128xf32>
    %192 = vector.multi_reduction <add>, %191, %cst_69 [0] : vector<8x128xf32> to vector<128xf32>
    %193 = vector.shape_cast %192 : vector<128xf32> to vector<1x128xf32>
    %cst_70 = arith.constant 0.000000e+00 : f32
    %194 = vector.broadcast %cst_70 : f32 to vector<1x128xf32>
    %195 = arith.subf %194, %193 : vector<1x128xf32>
    %196 = math.exp %195 : vector<1x128xf32>
    %cst_71 = arith.constant 1.000000e+00 : f32
    %197 = vector.broadcast %cst_71 : f32 to vector<1x128xf32>
    %198 = arith.addf %197, %196 : vector<1x128xf32>
    %199 = tpu.reciprocal %198 {approx = true} : vector<1x128xf32> -> vector<1x128xf32>
    %200 = arith.index_cast %c6_i32 : i32 to index
    %c0_72 = arith.constant 0 : index
    %201 = vector.load %arg9[%200, %c0_72] : memref<8x128xf32, #tpu.memory_space<vmem>>, vector<1x128xf32>
    tpu.vector_store %arg9[%200, %c0_72], %199 {strides = array<i32>} : memref<8x128xf32, #tpu.memory_space<vmem>>, vector<1x128xf32>,
    %c7_i32 = arith.constant 7 : i32
    %202 = arith.index_cast %c7_i32 : i32 to index
    %c0_73 = arith.constant 0 : index
    %203 = vector.load %arg2[%202, %c0_73] : memref<8x128xf32, #tpu.memory_space<vmem>>, vector<1x128xf32>
    %204 = vector.broadcast %203 : vector<1x128xf32> to vector<16x128xf32>
    %205 = arith.mulf %1, %204 : vector<16x128xf32>
    %206 = arith.truncf %205 : vector<16x128xf32> to vector<16x128xbf16>
    %cst_74 = arith.constant dense<0.000000e+00> : vector<16x128xf32>
    %207 = tpu.matmul %206, %0, %cst_74 {dimension_numbers = #tpu.dot_dimension_numbers<[1], [0], [0], [1], [0, 0, 1, 1], [], []>} : vector<16x128xbf16>, vector<128x128xbf16>, vector<16x128xf32> -> vector<16x128xf32>
    %208 = vector.broadcast %3 : vector<16x1xf32> to vector<16x128xf32>
    %209 = arith.addf %207, %208 : vector<16x128xf32>
    %cst_75 = arith.constant 0.000000e+00 : f32
    %210 = vector.broadcast %cst_75 : f32 to vector<16x128xf32>
    %211 = arith.maximumf %209, %210 : vector<16x128xf32>
    %212 = arith.truncf %211 : vector<16x128xf32> to vector<16x128xbf16>
    %cst_76 = arith.constant dense<0.000000e+00> : vector<8x128xf32>
    %213 = tpu.matmul %2, %212, %cst_76 {dimension_numbers = #tpu.dot_dimension_numbers<[1], [0], [0], [1], [0, 0, 1, 1], [], []>} : vector<8x16xbf16>, vector<16x128xbf16>, vector<8x128xf32> -> vector<8x128xf32>
    %214 = vector.broadcast %4 : vector<8x1xf32> to vector<8x128xf32>
    %215 = arith.addf %213, %214 : vector<8x128xf32>
    %cst_77 = arith.constant 0.000000e+00 : f32
    %216 = vector.broadcast %cst_77 : f32 to vector<8x128xf32>
    %217 = arith.maximumf %215, %216 : vector<8x128xf32>
    %218 = vector.broadcast %5 : vector<8x1xf32> to vector<8x128xf32>
    %219 = arith.mulf %217, %218 : vector<8x128xf32>
    %cst_78 = arith.constant dense<0.000000e+00> : vector<128xf32>
    %220 = vector.multi_reduction <add>, %219, %cst_78 [0] : vector<8x128xf32> to vector<128xf32>
    %221 = vector.shape_cast %220 : vector<128xf32> to vector<1x128xf32>
    %cst_79 = arith.constant 0.000000e+00 : f32
    %222 = vector.broadcast %cst_79 : f32 to vector<1x128xf32>
    %223 = arith.subf %222, %221 : vector<1x128xf32>
    %224 = math.exp %223 : vector<1x128xf32>
    %cst_80 = arith.constant 1.000000e+00 : f32
    %225 = vector.broadcast %cst_80 : f32 to vector<1x128xf32>
    %226 = arith.addf %225, %224 : vector<1x128xf32>
    %227 = tpu.reciprocal %226 {approx = true} : vector<1x128xf32> -> vector<1x128xf32>
    %228 = arith.index_cast %c7_i32 : i32 to index
    %c0_81 = arith.constant 0 : index
    %229 = vector.load %arg9[%228, %c0_81] : memref<8x128xf32, #tpu.memory_space<vmem>>, vector<1x128xf32>
    tpu.vector_store %arg9[%228, %c0_81], %227 {strides = array<i32>} : memref<8x128xf32, #tpu.memory_space<vmem>>, vector<1x128xf32>,
    %c8_i32 = arith.constant 8 : i32
    return
  }
  func.func @transform_0(%arg0: i32, %arg1: i32) -> (i32, i32) {
    %c0_i32 = arith.constant 0 : i32
    %c0_i32_0 = arith.constant 0 : i32
    return %arg0, %c0_i32 : i32, i32
  }
  func.func @transform_1(%arg0: i32, %arg1: i32) -> (i32, i32) {
    %c0_i32 = arith.constant 0 : i32
    %c0_i32_0 = arith.constant 0 : i32
    return %c0_i32, %arg1 : i32, i32
  }
  func.func @transform_2(%arg0: i32, %arg1: i32) -> (i32, i32) {
    %c0_i32 = arith.constant 0 : i32
    %c0_i32_0 = arith.constant 0 : i32
    %c0_i32_1 = arith.constant 0 : i32
    return %c0_i32, %c0_i32_0 : i32, i32
  }
  func.func @transform_3(%arg0: i32, %arg1: i32) -> (i32, i32) {
    %c0_i32 = arith.constant 0 : i32
    %c0_i32_0 = arith.constant 0 : i32
    %c0_i32_1 = arith.constant 0 : i32
    return %c0_i32, %c0_i32_0 : i32, i32
  }
  func.func @transform_4(%arg0: i32, %arg1: i32) -> (i32, i32) {
    %c0_i32 = arith.constant 0 : i32
    %c0_i32_0 = arith.constant 0 : i32
    %c0_i32_1 = arith.constant 0 : i32
    return %c0_i32, %c0_i32_0 : i32, i32
  }
  func.func @transform_5(%arg0: i32, %arg1: i32) -> (i32, i32) {
    %c0_i32 = arith.constant 0 : i32
    %c0_i32_0 = arith.constant 0 : i32
    %c0_i32_1 = arith.constant 0 : i32
    return %c0_i32, %c0_i32_0 : i32, i32
  }
  func.func @transform_6(%arg0: i32, %arg1: i32) -> (i32, i32) {
    %c0_i32 = arith.constant 0 : i32
    %c0_i32_0 = arith.constant 0 : i32
    %c0_i32_1 = arith.constant 0 : i32
    return %c0_i32, %c0_i32_0 : i32, i32
  }
  func.func @transform_7(%arg0: i32, %arg1: i32) -> (i32, i32) {
    %c0_i32 = arith.constant 0 : i32
    return %arg0, %arg1 : i32, i32
  }
}

module attributes {stable_mosaic.version = 11 : i64} {
  func.func @_fnn_kernel(%arg0: i32, %arg1: memref<32x16xbf16, #tpu.memory_space<vmem>>, %arg2: memref<16x32xbf16, #tpu.memory_space<vmem>>, %arg3: memref<1x32xf32, #tpu.memory_space<vmem>>, %arg4: memref<32x32xbf16, #tpu.memory_space<vmem>>, %arg5: memref<1x32xf32, #tpu.memory_space<vmem>>, %arg6: memref<32x128xbf16, #tpu.memory_space<vmem>>, %arg7: memref<1x128xf32, #tpu.memory_space<vmem>>, %arg8: memref<32x128xf32, #tpu.memory_space<vmem>>) attributes {dimension_semantics = [#tpu.dimension_semantics<parallel>], iteration_bounds = array<i64: 1>, scalar_prefetch = 0 : i64, scratch_operands = 0 : i64, tpu.core_type = #tpu.core_type<tc>, window_params = [{transform_indices = @transform_0, window_bounds = array<i64: 32, 16>}, {pipeline_mode = #tpu.pipeline_mode<synchronous>, transform_indices = @transform_1, window_bounds = array<i64: 16, 32>}, {pipeline_mode = #tpu.pipeline_mode<synchronous>, transform_indices = @transform_2, window_bounds = array<i64: 1, 32>}, {pipeline_mode = #tpu.pipeline_mode<synchronous>, transform_indices = @transform_3, window_bounds = array<i64: 32, 32>}, {pipeline_mode = #tpu.pipeline_mode<synchronous>, transform_indices = @transform_4, window_bounds = array<i64: 1, 32>}, {pipeline_mode = #tpu.pipeline_mode<synchronous>, transform_indices = @transform_5, window_bounds = array<i64: 32, 128>}, {pipeline_mode = #tpu.pipeline_mode<synchronous>, transform_indices = @transform_6, window_bounds = array<i64: 1, 128>}, {transform_indices = @transform_7, window_bounds = array<i64: 32, 128>}]} {
    %c0 = arith.constant 0 : index
    %c0_0 = arith.constant 0 : index
    %0 = vector.load %arg1[%c0, %c0_0] : memref<32x16xbf16, #tpu.memory_space<vmem>>, vector<32x16xbf16>
    %c0_1 = arith.constant 0 : index
    %c0_2 = arith.constant 0 : index
    %1 = vector.load %arg2[%c0_1, %c0_2] : memref<16x32xbf16, #tpu.memory_space<vmem>>, vector<16x32xbf16>
    %cst = arith.constant dense<0.000000e+00> : vector<32x32xf32>
    %2 = tpu.matmul %0, %1, %cst {dimension_numbers = #tpu.dot_dimension_numbers<[1], [0], [0], [1], [0, 0, 1, 1], [], []>} : vector<32x16xbf16>, vector<16x32xbf16>, vector<32x32xf32> -> vector<32x32xf32>
    %c0_3 = arith.constant 0 : index
    %c0_4 = arith.constant 0 : index
    %3 = vector.load %arg3[%c0_3, %c0_4] : memref<1x32xf32, #tpu.memory_space<vmem>>, vector<1x32xf32>
    %4 = vector.broadcast %3 : vector<1x32xf32> to vector<32x32xf32>
    %5 = arith.addf %2, %4 : vector<32x32xf32>
    %cst_5 = arith.constant 0.000000e+00 : f32
    %6 = vector.broadcast %cst_5 : f32 to vector<32x32xf32>
    %7 = arith.maximumf %5, %6 : vector<32x32xf32>
    %8 = arith.truncf %7 : vector<32x32xf32> to vector<32x32xbf16>
    %c0_6 = arith.constant 0 : index
    %c0_7 = arith.constant 0 : index
    %9 = vector.load %arg4[%c0_6, %c0_7] : memref<32x32xbf16, #tpu.memory_space<vmem>>, vector<32x32xbf16>
    %cst_8 = arith.constant dense<0.000000e+00> : vector<32x32xf32>
    %10 = tpu.matmul %8, %9, %cst_8 {dimension_numbers = #tpu.dot_dimension_numbers<[1], [0], [0], [1], [0, 0, 1, 1], [], []>} : vector<32x32xbf16>, vector<32x32xbf16>, vector<32x32xf32> -> vector<32x32xf32>
    %c0_9 = arith.constant 0 : index
    %c0_10 = arith.constant 0 : index
    %11 = vector.load %arg5[%c0_9, %c0_10] : memref<1x32xf32, #tpu.memory_space<vmem>>, vector<1x32xf32>
    %12 = vector.broadcast %11 : vector<1x32xf32> to vector<32x32xf32>
    %13 = arith.addf %10, %12 : vector<32x32xf32>
    %cst_11 = arith.constant 0.000000e+00 : f32
    %14 = vector.broadcast %cst_11 : f32 to vector<32x32xf32>
    %15 = arith.maximumf %13, %14 : vector<32x32xf32>
    %16 = arith.truncf %15 : vector<32x32xf32> to vector<32x32xbf16>
    %c0_12 = arith.constant 0 : index
    %c0_13 = arith.constant 0 : index
    %17 = vector.load %arg6[%c0_12, %c0_13] : memref<32x128xbf16, #tpu.memory_space<vmem>>, vector<32x128xbf16>
    %cst_14 = arith.constant dense<0.000000e+00> : vector<32x128xf32>
    %18 = tpu.matmul %16, %17, %cst_14 {dimension_numbers = #tpu.dot_dimension_numbers<[1], [0], [0], [1], [0, 0, 1, 1], [], []>} : vector<32x32xbf16>, vector<32x128xbf16>, vector<32x128xf32> -> vector<32x128xf32>
    %c0_15 = arith.constant 0 : index
    %c0_16 = arith.constant 0 : index
    %19 = vector.load %arg7[%c0_15, %c0_16] : memref<1x128xf32, #tpu.memory_space<vmem>>, vector<1x128xf32>
    %20 = vector.broadcast %19 : vector<1x128xf32> to vector<32x128xf32>
    %21 = arith.addf %18, %20 : vector<32x128xf32>
    %c0_17 = arith.constant 0 : index
    %c0_18 = arith.constant 0 : index
    %22 = vector.load %arg8[%c0_17, %c0_18] : memref<32x128xf32, #tpu.memory_space<vmem>>, vector<32x128xf32>
    tpu.vector_store %arg8[%c0_17, %c0_18], %21 {strides = array<i32>} : memref<32x128xf32, #tpu.memory_space<vmem>>, vector<32x128xf32>,
    return
  }
  func.func @transform_0(%arg0: i32) -> (i32, i32) {
    %c0_i32 = arith.constant 0 : i32
    %c0_i32_0 = arith.constant 0 : i32
    return %arg0, %c0_i32 : i32, i32
  }
  func.func @transform_1(%arg0: i32) -> (i32, i32) {
    %c0_i32 = arith.constant 0 : i32
    %c0_i32_0 = arith.constant 0 : i32
    %c0_i32_1 = arith.constant 0 : i32
    return %c0_i32, %c0_i32_0 : i32, i32
  }
  func.func @transform_2(%arg0: i32) -> (i32, i32) {
    %c0_i32 = arith.constant 0 : i32
    %c0_i32_0 = arith.constant 0 : i32
    %c0_i32_1 = arith.constant 0 : i32
    return %c0_i32, %c0_i32_0 : i32, i32
  }
  func.func @transform_3(%arg0: i32) -> (i32, i32) {
    %c0_i32 = arith.constant 0 : i32
    %c0_i32_0 = arith.constant 0 : i32
    %c0_i32_1 = arith.constant 0 : i32
    return %c0_i32, %c0_i32_0 : i32, i32
  }
  func.func @transform_4(%arg0: i32) -> (i32, i32) {
    %c0_i32 = arith.constant 0 : i32
    %c0_i32_0 = arith.constant 0 : i32
    %c0_i32_1 = arith.constant 0 : i32
    return %c0_i32, %c0_i32_0 : i32, i32
  }
  func.func @transform_5(%arg0: i32) -> (i32, i32) {
    %c0_i32 = arith.constant 0 : i32
    %c0_i32_0 = arith.constant 0 : i32
    %c0_i32_1 = arith.constant 0 : i32
    return %c0_i32, %c0_i32_0 : i32, i32
  }
  func.func @transform_6(%arg0: i32) -> (i32, i32) {
    %c0_i32 = arith.constant 0 : i32
    %c0_i32_0 = arith.constant 0 : i32
    %c0_i32_1 = arith.constant 0 : i32
    return %c0_i32, %c0_i32_0 : i32, i32
  }
  func.func @transform_7(%arg0: i32) -> (i32, i32) {
    %c0_i32 = arith.constant 0 : i32
    %c0_i32_0 = arith.constant 0 : i32
    return %arg0, %c0_i32 : i32, i32
  }
}

</mosaic_0001>

<llo_original>
// kernel: model_ncacf_forward.2
$region0: #{model_ncacf_forward.2}
  #allocation0 [shape = 'u32[]', space=smem, size = 0x4, offset = 0x4, fixed_abs, tag = 'smem constant byte address 0x4 - core index']
  #allocation1 [shape = 'u32[72,128]{1,0:T(1,128)}', space=vmem, size = 0x9000, scoped, tag = 'internal scratch']
  %s0 = inlined_call_operand.vmem [shape: bf16[32,16], index: 0, kind: input, shape index: {}]
  %s1 = inlined_call_operand.vmem [shape: bf16[16,32], index: 1, kind: input, shape index: {}]
  %s2 = inlined_call_operand.vmem [shape: f32[1,32], index: 2, kind: input, shape index: {}]
  %s3 = inlined_call_operand.vmem [shape: bf16[32,32], index: 3, kind: input, shape index: {}]
  %s4 = inlined_call_operand.vmem [shape: f32[1,32], index: 4, kind: input, shape index: {}]
  %s5 = inlined_call_operand.vmem [shape: bf16[32,128], index: 5, kind: input, shape index: {}]
  %s6 = inlined_call_operand.vmem [shape: f32[1,128], index: 6, kind: input, shape index: {}]
  %s7 = inlined_call_operand.hbm [shape: f32[32,128], index: 7, kind: output, shape index: {}]
  %s8 = sld [smem:[#allocation0]]
  $region38: #{model_ncacf_forward.2} parent=0
    _
  %s10 = ssub.s32 1, %s8
  %s11 = scalar_select 0, %s10, %s8
  $region1: #{model_ncacf_forward.2} parent=0
    #allocation2 [shape = 'u8[16384]{0}', space=vmem, size = 0x4000, scoped, tag = 'output window, operand 0, single buffered']
    #allocation3 [shape = 's32[1]{0}', space=sflag, size = 0x4, scoped, tag = 'scoped memory for model_ncacf_forward.2']
    %12 = vsyncpa [#allocation3], 0
    // Predicated region
    $region2: #{model_ncacf_forward.2} parent=1 // pred_check
      _
    $region3: #{model_ncacf_forward.2} parent=1 // pred_check_branch
      %14 = sbr.rel (0) target = $region5
    $region4: #{model_ncacf_forward.2} parent=1 // pred_region
      _
    $region5: #{model_ncacf_forward.2} parent=1 // pred_fallthru
      _
    // Predicated region
    $region6: #{model_ncacf_forward.2} parent=1 // pred_check
      _
    $region7: #{model_ncacf_forward.2} parent=1 // pred_check_branch
      %16 = sbr.rel (0) target = $region9
    $region8: #{model_ncacf_forward.2} parent=1 // pred_region
      _
    $region9: #{model_ncacf_forward.2} parent=1 // pred_fallthru
      _
    // Predicated region
    $region10: #{model_ncacf_forward.2} parent=1 // pred_check
      _
    $region11: #{model_ncacf_forward.2} parent=1 // pred_check_branch
      %18 = sbr.rel (0) target = $region13
    $region12: #{model_ncacf_forward.2} parent=1 // pred_region
      _
    $region13: #{model_ncacf_forward.2} parent=1 // pred_fallthru
      _
    // Predicated region
    $region14: #{model_ncacf_forward.2} parent=1 // pred_check
      _
    $region15: #{model_ncacf_forward.2} parent=1 // pred_check_branch
      %20 = sbr.rel (0) target = $region17
    $region16: #{model_ncacf_forward.2} parent=1 // pred_region
      _
    $region17: #{model_ncacf_forward.2} parent=1 // pred_fallthru
      _
    // Predicated region
    $region18: #{model_ncacf_forward.2} parent=1 // pred_check
      _
    $region19: #{model_ncacf_forward.2} parent=1 // pred_check_branch
      %22 = sbr.rel (0) target = $region21
    $region20: #{model_ncacf_forward.2} parent=1 // pred_region
      _
    $region21: #{model_ncacf_forward.2} parent=1 // pred_fallthru
      _
    // Predicated region
    $region22: #{model_ncacf_forward.2} parent=1 // pred_check
      _
    $region23: #{model_ncacf_forward.2} parent=1 // pred_check_branch
      %24 = sbr.rel (0) target = $region25
    $region24: #{model_ncacf_forward.2} parent=1 // pred_region
      _
    $region25: #{model_ncacf_forward.2} parent=1 // pred_fallthru
      _
    // Predicated region
    $region26: #{model_ncacf_forward.2} parent=1 // pred_check
      _
    $region27: #{model_ncacf_forward.2} parent=1 // pred_check_branch
      %26 = sbr.rel (0) target = $region29
    $region28: #{model_ncacf_forward.2} parent=1 // pred_region
      _
    $region29: #{model_ncacf_forward.2} parent=1 // pred_fallthru
      _
    %v28 = vld [vmem:[%s0] sm:$0xf]
    %v29 = vld [vmem:[%s0 + $0x4] sm:$0xf]
    %v30 = vld [vmem:[%s0 + $0x8] sm:$0xf]
    %v31 = vld [vmem:[%s0 + $0xc] sm:$0xf]
    %v32 = vld [vmem:[%s1] sm:$0xf]
    %v33 = vld [vmem:[%s1 + $0x4] sm:$0xf]
    %v34 = vld [vmem:[%s2] sm:$0x1]
    %v36 = vperm.slane %v34, 0
    %v42 = vunpack.c.l.b16 %v28
    %v43 = vunpack.c.l.b16 %v29
    %v44 = vunpack.c.l.b16 %v30
    %v45 = vunpack.c.l.b16 %v31
    %v46 = vpack.c.b16 %v43, %v42
    %v47 = vpack.c.b16 %v45, %v44
    %v50 = vunpack.c.l.b16 %v32
    %v51 = vunpack.c.l.b16 %v33
    %v52 = vpack.c.b16 %v51, %v50
    %vm54 = vcmask 130048
    %v56 = vsel %vm54, %v46, 0
    %v59 = vsel %vm54, %v47, 0
    %61 = vmatpush.bf16.msra.mxu0 0
    %62 = vmatpush.bf16.msra.mxu0 0
    %63 = vmatpush.bf16.msra.mxu0 0
    %64 = vmatpush.bf16.msra.mxu0 0
    %65 = vmatpush.bf16.msra.mxu0 0
    %66 = vmatpush.bf16.msra.mxu0 0
    %67 = vmatpush.bf16.msra.mxu0 0
    %68 = vmatpush.bf16.msra.mxu0 %v52
    %69 = vmatmul.bf16.gmra.mxu0 %v56
    %v70 = vpop.f32.mrf.mxu0
    %v71 = vadd.f32 %v36, %v70
    %v72 = vpop.f32.mrf.mxu0
    %v73 = vadd.f32 %v36, %v72
    %74 = vmatmul.bf16.gmra.mxu0 %v59
    %v75 = vpop.f32.mrf.mxu0
    %v76 = vadd.f32 %v36, %v75
    %v77 = vpop.f32.mrf.mxu0
    %v78 = vadd.f32 %v36, %v77
    %79 = vdwg.mxu0
    %v80 = vmax.f32 %v71, 0.0
    %v81 = vmax.f32 %v73, 0.0
    %v82 = vmax.f32 %v76, 0.0
    %v83 = vmax.f32 %v78, 0.0
    %v84 = vpack.c.bf16 %v81, %v80
    %v85 = vpack.c.bf16 %v83, %v82
    %v86 = vld [vmem:[%s3] sm:$0xf]
    %v87 = vld [vmem:[%s3 + $0x4] sm:$0xf]
    %v88 = vld [vmem:[%s3 + $0x8] sm:$0xf]
    %v89 = vld [vmem:[%s3 + $0xc] sm:$0xf]
    %v90 = vld [vmem:[%s4] sm:$0x1]
    %v92 = vperm.slane %v90, 0
    %v98 = vunpack.c.l.b16 %v86
    %v99 = vunpack.c.l.b16 %v87
    %v100 = vunpack.c.l.b16 %v88
    %v101 = vunpack.c.l.b16 %v89
    %v102 = vpack.c.b16 %v99, %v98
    %v103 = vpack.c.b16 %v101, %v100
    %vm106 = vcmask 261120
    %v108 = vsel %vm106, %v84, 0
    %v111 = vsel %vm106, %v85, 0
    %113 = vmatpush.bf16.msra.mxu0 0
    %114 = vmatpush.bf16.msra.mxu0 0
    %115 = vmatpush.bf16.msra.mxu0 0
    %116 = vmatpush.bf16.msra.mxu0 0
    %117 = vmatpush.bf16.msra.mxu0 0
    %118 = vmatpush.bf16.msra.mxu0 0
    %119 = vmatpush.bf16.msra.mxu0 %v103
    %120 = vmatpush.bf16.msra.mxu0 %v102
    %121 = vmatmul.bf16.gmra.mxu0 %v108
    %v122 = vpop.f32.mrf.mxu0
    %v123 = vadd.f32 %v92, %v122
    %v124 = vpop.f32.mrf.mxu0
    %v125 = vadd.f32 %v92, %v124
    %126 = vmatmul.bf16.gmra.mxu0 %v111
    %v127 = vpop.f32.mrf.mxu0
    %v128 = vadd.f32 %v92, %v127
    %v129 = vpop.f32.mrf.mxu0
    %v130 = vadd.f32 %v92, %v129
    %131 = vdwg.mxu0
    %v132 = vmax.f32 %v123, 0.0
    %v133 = vmax.f32 %v125, 0.0
    %v134 = vmax.f32 %v128, 0.0
    %v135 = vmax.f32 %v130, 0.0
    %v136 = vpack.c.bf16 %v133, %v132
    %v137 = vpack.c.bf16 %v135, %v134
    %v138 = vld [vmem:[%s5] sm:$0xf]
    %v139 = vld [vmem:[%s5 + $0x4] sm:$0xf]
    %v140 = vld [vmem:[%s5 + $0x8] sm:$0xf]
    %v141 = vld [vmem:[%s5 + $0xc] sm:$0xf]
    %v142 = vld [vmem:[%s6] sm:$0x1]
    %v144 = vperm.slane %v142, 0
    %v150 = vunpack.c.l.b16 %v138
    %v151 = vunpack.c.l.b16 %v139
    %v152 = vunpack.c.l.b16 %v140
    %v153 = vunpack.c.l.b16 %v141
    %v154 = vpack.c.b16 %v151, %v150
    %v155 = vpack.c.b16 %v153, %v152
    %v159 = vsel %vm106, %v136, 0
    %v162 = vsel %vm106, %v137, 0
    %164 = vmatpush.bf16.msra.mxu0 0
    %165 = vmatpush.bf16.msra.mxu0 0
    %166 = vmatpush.bf16.msra.mxu0 0
    %167 = vmatpush.bf16.msra.mxu0 0
    %168 = vmatpush.bf16.msra.mxu0 0
    %169 = vmatpush.bf16.msra.mxu0 0
    %170 = vmatpush.bf16.msra.mxu0 %v155
    %171 = vmatpush.bf16.msra.mxu0 %v154
    %172 = vmatmul.bf16.gmra.mxu0 %v159
    %v173 = vpop.f32.mrf.mxu0
    %v174 = vadd.f32 %v144, %v173
    %v175 = vpop.f32.mrf.mxu0
    %v176 = vadd.f32 %v144, %v175
    %177 = vmatmul.bf16.gmra.mxu0 %v162
    %v178 = vpop.f32.mrf.mxu0
    %v179 = vadd.f32 %v144, %v178
    %v180 = vpop.f32.mrf.mxu0
    %v181 = vadd.f32 %v144, %v180
    %182 = vdwg.mxu0
    %183 = vst [vmem:[#allocation2] sm:$0xff] %v174
    %184 = vst [vmem:[#allocation2 + $0x8] sm:$0xff] %v176
    %185 = vst [vmem:[#allocation2 + $0x10] sm:$0xff] %v179
    %186 = vst [vmem:[#allocation2 + $0x18] sm:$0xff] %v181
    // Predicated region
    $region30: #{model_ncacf_forward.2} parent=1 // pred_check
      _
    $region31: #{model_ncacf_forward.2} parent=1 // pred_check_branch
      %188 = sbr.rel (0) target = $region33
    $region32: #{model_ncacf_forward.2} parent=1 // pred_region
      %190 = vsyncadd [#allocation3], 0
      %s191 = sshll.u32 [#allocation2], 4
      %s192 = int_to_ptr.vmem [resolvable:$true] %s191
      %s193 = sshll.u32 %s7, 4
      %s194 = int_to_ptr.hbm [resolvable:$true] %s193
      %199 = dma.vmem_to_hbm [thread:$0]  %s192, 512, %s194, [#allocation3], 128, 128, 8
    $region33: #{model_ncacf_forward.2} parent=1 // pred_fallthru
      _
    // Predicated region
    $region34: #{model_ncacf_forward.2} parent=1 // pred_check
      _
    $region35: #{model_ncacf_forward.2} parent=1 // pred_check_branch
      %201 = sbr.rel (0) target = $region37
    $region36: #{model_ncacf_forward.2} parent=1 // pred_region
      %203 = dma.done [#allocation3], 512
    $region37: #{model_ncacf_forward.2} parent=1 // pred_fallthru
      _
    %204 = vsyncpa [#allocation3], 1

// kernel: model_ncacf_forward.3
$region0: #{model_ncacf_forward.3}
  #allocation0 [shape = 'u32[]', space=smem, size = 0x4, offset = 0x4, fixed_abs, tag = 'smem constant byte address 0x4 - core index']
  #allocation1 [shape = 'u32[72,128]{1,0:T(1,128)}', space=vmem, size = 0x9000, scoped, tag = 'internal scratch']
  %s0 = inlined_call_operand.vmem [shape: f32[16,128], index: 0, kind: input, shape index: {}]
  %s1 = inlined_call_operand.vmem [shape: bf16[128,128], index: 1, kind: input, shape index: {}]
  %s2 = inlined_call_operand.vmem [shape: f32[16,128], index: 2, kind: input, shape index: {}]
  %s3 = inlined_call_operand.vmem [shape: f32[16,1], index: 3, kind: input, shape index: {}]
  %s4 = inlined_call_operand.vmem [shape: bf16[8,16], index: 4, kind: input, shape index: {}]
  %s5 = inlined_call_operand.vmem [shape: f32[8,1], index: 5, kind: input, shape index: {}]
  %s6 = inlined_call_operand.vmem [shape: f32[8,1], index: 6, kind: input, shape index: {}]
  %s7 = inlined_call_operand.hbm [shape: f32[16,128], index: 7, kind: output, shape index: {}]
  %s8 = sld [smem:[#allocation0]]
  $region61: #{model_ncacf_forward.3} parent=0
    _
  %s10 = ssub.s32 1, %s8
  %s11 = scalar_select 0, %s10, %s8
  $region1: #{model_ncacf_forward.3} parent=0
    #allocation2 [shape = 'u8[8192]{0}', space=vmem, size = 0x2000, scoped, tag = 'output window, operand 0']
    #allocation3 [shape = 's32[2]{0}', space=sflag, size = 0x8, scoped, tag = 'scoped memory for model_ncacf_forward.3']
    %12 = vsyncpa [#allocation3], 0
    %s13 = scalar_lea.sflag [#allocation3], 1
    %14 = vsyncpa %s13, 0
    loop: start=0, step=1, limit=4
    $region2: #{model_ncacf_forward.3} parent=1 // loop_pre_header
      _
    $region3: #{model_ncacf_forward.3} parent=1 // loop_header
      %s16 = sphi 0, %s20
      %p17 = scmp.ge.s32.totalorder %s16, 4
      %s23 = sphi 0, %s35
      %s24 = sphi 0, %s31
      %s25 = sphi 0, %s23
      %s26 = sphi 0, %s24
      %s27 = sphi 0, %s25
      %s28 = sphi 0, %s26
      %s38 = sphi 0, %s40
      %s41 = sphi 0, %s38
      %s42 = sphi 0, %s41
      %s58 = sphi 0, %s42
      %s64 = sphi 0, %s66
      %s67 = sphi 0, %s64
      %s68 = sphi 0, %s67
      %s84 = sphi 0, %s68
      %s88 = sphi 0, %s88
      %s90 = sphi 0, %s88
      %s91 = sphi 0, %s90
      %s105 = sphi 0, %s91
      %s109 = sphi 0, %s109
      %s111 = sphi 0, %s109
      %s112 = sphi 0, %s111
      %s126 = sphi 0, %s112
      %s130 = sphi 0, %s130
      %s132 = sphi 0, %s130
      %s133 = sphi 0, %s132
      %s147 = sphi 0, %s133
      %s151 = sphi 0, %s151
      %s153 = sphi 0, %s151
      %s154 = sphi 0, %s153
      %s168 = sphi 0, %s154
      %s172 = sphi 0, %s172
      %s174 = sphi 0, %s172
      %s175 = sphi 0, %s174
      %s189 = sphi 0, %s175
      %s197 = sphi 0, %s199
      %s200 = sphi 0, %s197
      %s201 = sphi 0, %s200
      %s217 = sphi 0, %s201
    $region4: #{model_ncacf_forward.3} parent=1 // loop_header_branch
      %19 = sbr.rel (%p17) target = $region8
    $region5: #{model_ncacf_forward.3} parent=1 // loop_body
      %s21 = ssub.s32 %s16, 1
      %s22 = ssub.s32 %s16, 2
      %s29 = sadd.s32 1, %s24
      %p30 = scmp.ge.s32.totalorder %s29, 1
      %s31 = scalar_select %p30, 0, %s29
      %s32 = sadd.s32 1, %s23
      %s33 = scalar_select %p30, %s32, %s23
      %p34 = scmp.ge.s32.totalorder %s33, 2
      %s35 = scalar_select %p34, 0, %s33
      %s36 = ssub.s32 %s23, %s35
      %p37 = scmp.eq.s32.totalorder %s36, 0
      %s39 = sadd.s32 %s38, 1
      %s40 = scalar_select %p37, %s38, %s39
      %p43 = pneg %p37
      %p44 = scmp.eq.s32.totalorder %s16, 1
      %p45 = por %p43, %p44
      %p46 = scmp.ne.s32.totalorder %s38, %s41
      %p47 = scmp.eq.s32.totalorder %s16, 0
      %p48 = por %p46, %p47
      %p49 = scmp.ne.s32.totalorder %s38, %s41
      %p50 = scmp.eq.s32.totalorder %s21, 1
      %p51 = por %p49, %p50
      %p52 = scmp.ne.s32.totalorder %s41, %s42
      %p53 = scmp.eq.s32.totalorder %s21, 0
      %p54 = por %p52, %p53
      %p55 = scmp.ne.s32.totalorder %s41, %s42
      %p56 = scmp.eq.s32.totalorder %s22, 1
      %p57 = por %p55, %p56
      %p59 = scmp.ne.s32.totalorder %s42, %s58
      %p60 = scmp.eq.s32.totalorder %s22, 0
      %p61 = por %p59, %p60
      %s62 = ssub.s32 %s24, %s31
      %p63 = scmp.eq.s32.totalorder %s62, 0
      %s65 = sadd.s32 %s64, 1
      %s66 = scalar_select %p63, %s64, %s65
      %p69 = pneg %p63
      %p70 = scmp.eq.s32.totalorder %s16, 1
      %p71 = por %p69, %p70
      %p72 = scmp.ne.s32.totalorder %s64, %s67
      %p73 = scmp.eq.s32.totalorder %s16, 0
      %p74 = por %p72, %p73
      %p75 = scmp.ne.s32.totalorder %s64, %s67
      %p76 = scmp.eq.s32.totalorder %s21, 1
      %p77 = por %p75, %p76
      %p78 = scmp.ne.s32.totalorder %s67, %s68
      %p79 = scmp.eq.s32.totalorder %s21, 0
      %p80 = por %p78, %p79
      %p81 = scmp.ne.s32.totalorder %s67, %s68
      %p82 = scmp.eq.s32.totalorder %s22, 1
      %p83 = por %p81, %p82
      %p85 = scmp.ne.s32.totalorder %s68, %s84
      %p86 = scmp.eq.s32.totalorder %s22, 0
      %p87 = por %p85, %p86
      %s89 = sadd.s32 %s88, 1
      %p92 = scmp.eq.s32.totalorder %s16, 1
      %p93 = scmp.ne.s32.totalorder %s88, %s90
      %p94 = scmp.eq.s32.totalorder %s16, 0
      %p95 = por %p93, %p94
      %p96 = scmp.ne.s32.totalorder %s88, %s90
      %p97 = scmp.eq.s32.totalorder %s21, 1
      %p98 = por %p96, %p97
      %p99 = scmp.ne.s32.totalorder %s90, %s91
      %p100 = scmp.eq.s32.totalorder %s21, 0
      %p101 = por %p99, %p100
      %p102 = scmp.ne.s32.totalorder %s90, %s91
      %p103 = scmp.eq.s32.totalorder %s22, 1
      %p104 = por %p102, %p103
      %p106 = scmp.ne.s32.totalorder %s91, %s105
      %p107 = scmp.eq.s32.totalorder %s22, 0
      %p108 = por %p106, %p107
      %s110 = sadd.s32 %s109, 1
      %p113 = scmp.eq.s32.totalorder %s16, 1
      %p114 = scmp.ne.s32.totalorder %s109, %s111
      %p115 = scmp.eq.s32.totalorder %s16, 0
      %p116 = por %p114, %p115
      %p117 = scmp.ne.s32.totalorder %s109, %s111
      %p118 = scmp.eq.s32.totalorder %s21, 1
      %p119 = por %p117, %p118
      %p120 = scmp.ne.s32.totalorder %s111, %s112
      %p121 = scmp.eq.s32.totalorder %s21, 0
      %p122 = por %p120, %p121
      %p123 = scmp.ne.s32.totalorder %s111, %s112
      %p124 = scmp.eq.s32.totalorder %s22, 1
      %p125 = por %p123, %p124
      %p127 = scmp.ne.s32.totalorder %s112, %s126
      %p128 = scmp.eq.s32.totalorder %s22, 0
      %p129 = por %p127, %p128
      %s131 = sadd.s32 %s130, 1
      %p134 = scmp.eq.s32.totalorder %s16, 1
      %p135 = scmp.ne.s32.totalorder %s130, %s132
      %p136 = scmp.eq.s32.totalorder %s16, 0
      %p137 = por %p135, %p136
      %p138 = scmp.ne.s32.totalorder %s130, %s132
      %p139 = scmp.eq.s32.totalorder %s21, 1
      %p140 = por %p138, %p139
      %p141 = scmp.ne.s32.totalorder %s132, %s133
      %p142 = scmp.eq.s32.totalorder %s21, 0
      %p143 = por %p141, %p142
      %p144 = scmp.ne.s32.totalorder %s132, %s133
      %p145 = scmp.eq.s32.totalorder %s22, 1
      %p146 = por %p144, %p145
      %p148 = scmp.ne.s32.totalorder %s133, %s147
      %p149 = scmp.eq.s32.totalorder %s22, 0
      %p150 = por %p148, %p149
      %s152 = sadd.s32 %s151, 1
      %p155 = scmp.eq.s32.totalorder %s16, 1
      %p156 = scmp.ne.s32.totalorder %s151, %s153
      %p157 = scmp.eq.s32.totalorder %s16, 0
      %p158 = por %p156, %p157
      %p159 = scmp.ne.s32.totalorder %s151, %s153
      %p160 = scmp.eq.s32.totalorder %s21, 1
      %p161 = por %p159, %p160
      %p162 = scmp.ne.s32.totalorder %s153, %s154
      %p163 = scmp.eq.s32.totalorder %s21, 0
      %p164 = por %p162, %p163
      %p165 = scmp.ne.s32.totalorder %s153, %s154
      %p166 = scmp.eq.s32.totalorder %s22, 1
      %p167 = por %p165, %p166
      %p169 = scmp.ne.s32.totalorder %s154, %s168
      %p170 = scmp.eq.s32.totalorder %s22, 0
      %p171 = por %p169, %p170
      %s173 = sadd.s32 %s172, 1
      %p176 = scmp.eq.s32.totalorder %s16, 1
      %p177 = scmp.ne.s32.totalorder %s172, %s174
      %p178 = scmp.eq.s32.totalorder %s16, 0
      %p179 = por %p177, %p178
      %p180 = scmp.ne.s32.totalorder %s172, %s174
      %p181 = scmp.eq.s32.totalorder %s21, 1
      %p182 = por %p180, %p181
      %p183 = scmp.ne.s32.totalorder %s174, %s175
      %p184 = scmp.eq.s32.totalorder %s21, 0
      %p185 = por %p183, %p184
      %p186 = scmp.ne.s32.totalorder %s174, %s175
      %p187 = scmp.eq.s32.totalorder %s22, 1
      %p188 = por %p186, %p187
      %p190 = scmp.ne.s32.totalorder %s175, %s189
      %p191 = scmp.eq.s32.totalorder %s22, 0
      %p192 = por %p190, %p191
      %s193 = ssub.s32 %s23, %s35
      %s194 = ssub.s32 %s24, %s31
      %s195 = sor.u32 %s193, %s194
      %p196 = scmp.eq.s32.totalorder %s195, 0
      %s198 = sadd.s32 %s197, 1
      %s199 = scalar_select %p196, %s197, %s198
      %p202 = pneg %p196
      %p203 = scmp.eq.s32.totalorder %s16, 1
      %p204 = por %p202, %p203
      %p205 = scmp.ne.s32.totalorder %s197, %s200
      %p206 = scmp.eq.s32.totalorder %s16, 0
      %p207 = por %p205, %p206
      %p208 = scmp.ne.s32.totalorder %s197, %s200
      %p209 = scmp.eq.s32.totalorder %s21, 1
      %p210 = por %p208, %p209
      %p211 = scmp.ne.s32.totalorder %s200, %s201
      %p212 = scmp.eq.s32.totalorder %s21, 0
      %p213 = por %p211, %p212
      %p214 = scmp.ne.s32.totalorder %s200, %s201
      %p215 = scmp.eq.s32.totalorder %s22, 1
      %p216 = por %p214, %p215
      %p218 = scmp.ne.s32.totalorder %s201, %s217
      %p219 = scmp.eq.s32.totalorder %s22, 0
      %p220 = por %p218, %p219
      %p221 = scmp.le.s32.totalorder 1, %s16
      %p222 = scmp.lt.s32.totalorder %s16, 3
      %p223 = pnand %p221, %p222
      %p224 = pneg %p223
      // Predicated region
      $region9: #{model_ncacf_forward.3} parent=5 // pred_check
        _
      $region10: #{model_ncacf_forward.3} parent=5 // pred_check_branch
        %226 = sbr.rel (%p223) target = $region12
      $region11: #{model_ncacf_forward.3} parent=5 // pred_region
        %s227 = ssub.s32 %s16, 1
        // Predicated region
        $region13: #{model_ncacf_forward.3} parent=11 // pred_check
          %p228 = pneg %p80
        $region14: #{model_ncacf_forward.3} parent=11 // pred_check_branch
          %230 = sbr.rel (%p228) target = $region16
        $region15: #{model_ncacf_forward.3} parent=11 // pred_region
          %p231 = scmp.lt.s32.totalorder %s26, 0
          %s232 = scalar_select %p231, %s26, 0
          %s233 = smul.addr %s232, 4
          %s234 = scalar_lea.vmem %s1, %s233
        $region16: #{model_ncacf_forward.3} parent=11 // pred_fallthru
          _
        // Predicated region
        $region17: #{model_ncacf_forward.3} parent=11 // pred_check
          %p235 = pneg %p101
        $region18: #{model_ncacf_forward.3} parent=11 // pred_check_branch
          %237 = sbr.rel (%p235) target = $region20
        $region19: #{model_ncacf_forward.3} parent=11 // pred_region
          _
        $region20: #{model_ncacf_forward.3} parent=11 // pred_fallthru
          _
        // Predicated region
        $region21: #{model_ncacf_forward.3} parent=11 // pred_check
          %p238 = pneg %p122
        $region22: #{model_ncacf_forward.3} parent=11 // pred_check_branch
          %240 = sbr.rel (%p238) target = $region24
        $region23: #{model_ncacf_forward.3} parent=11 // pred_region
          _
        $region24: #{model_ncacf_forward.3} parent=11 // pred_fallthru
          _
        // Predicated region
        $region25: #{model_ncacf_forward.3} parent=11 // pred_check
          %p241 = pneg %p143
        $region26: #{model_ncacf_forward.3} parent=11 // pred_check_branch
          %243 = sbr.rel (%p241) target = $region28
        $region27: #{model_ncacf_forward.3} parent=11 // pred_region
          _
        $region28: #{model_ncacf_forward.3} parent=11 // pred_fallthru
          _
        // Predicated region
        $region29: #{model_ncacf_forward.3} parent=11 // pred_check
          %p244 = pneg %p164
        $region30: #{model_ncacf_forward.3} parent=11 // pred_check_branch
          %246 = sbr.rel (%p244) target = $region32
        $region31: #{model_ncacf_forward.3} parent=11 // pred_region
          _
        $region32: #{model_ncacf_forward.3} parent=11 // pred_fallthru
          _
        // Predicated region
        $region33: #{model_ncacf_forward.3} parent=11 // pred_check
          %p247 = pneg %p185
        $region34: #{model_ncacf_forward.3} parent=11 // pred_check_branch
          %249 = sbr.rel (%p247) target = $region36
        $region35: #{model_ncacf_forward.3} parent=11 // pred_region
          _
        $region36: #{model_ncacf_forward.3} parent=11 // pred_fallthru
          _
      $region12: #{model_ncacf_forward.3} parent=5 // pred_fallthru
        _
      %p250 = scmp.lt.s32.totalorder %s16, 2
      // Predicated region
      $region37: #{model_ncacf_forward.3} parent=5 // pred_check
        %p251 = pneg %p250
      $region38: #{model_ncacf_forward.3} parent=5 // pred_check_branch
        %253 = sbr.rel (%p251) target = $region40
      $region39: #{model_ncacf_forward.3} parent=5 // pred_region
        // Predicated region
        $region41: #{model_ncacf_forward.3} parent=39 // pred_check
          %p254 = pneg %p48
        $region42: #{model_ncacf_forward.3} parent=39 // pred_check_branch
          %256 = sbr.rel (%p254) target = $region44
        $region43: #{model_ncacf_forward.3} parent=39 // pred_region
          %p257 = scmp.lt.s32.totalorder %s23, 1
          %s258 = scalar_select %p257, %s23, 1
          %s259 = smul.addr %s258, 8
          %s260 = scalar_lea.vmem %s0, %s259
        $region44: #{model_ncacf_forward.3} parent=39 // pred_fallthru
          _
      $region40: #{model_ncacf_forward.3} parent=5 // pred_fallthru
        _
      %p261 = scmp.le.s32.totalorder 1, %s16
      %p262 = scmp.lt.s32.totalorder %s16, 3
      %p263 = pnand %p261, %p262
      %p264 = pneg %p263
      // Predicated region
      $region45: #{model_ncacf_forward.3} parent=5 // pred_check
        _
      $region46: #{model_ncacf_forward.3} parent=5 // pred_check_branch
        %266 = sbr.rel (%p263) target = $region48
      $region47: #{model_ncacf_forward.3} parent=5 // pred_region
        %s267 = ssub.s32 %s16, 1
        %p268 = scmp.lt.s32.totalorder %s25, 1
        %s269 = scalar_select %p268, %s25, 1
        %s270 = smul.addr %s269, 8
        %s271 = scalar_lea.vmem %s0, %s270
        %p272 = pneg %p54
        %p273 = pneg %p51
        %p274 = scmp.lt.s32.totalorder %s26, 0
        %s275 = scalar_select %p274, %s26, 0
        %s276 = smul.addr %s275, 4
        %s277 = scalar_lea.vmem %s1, %s276
        %p278 = pneg %p80
        %p279 = pneg %p77
        %p280 = pneg %p101
        %p281 = pneg %p98
        %p282 = pneg %p122
        %p283 = pneg %p119
        %p284 = pneg %p143
        %p285 = pneg %p140
        %p286 = pneg %p164
        %p287 = pneg %p161
        %p288 = pneg %p185
        %p289 = pneg %p182
        %p290 = pneg %p213
        %p291 = pneg %p210
        %s292 = sand.u32 %s200, 1
        %s293 = scalar_lea.sflag [#allocation3], %s292
        %s294 = sand.u32 %s200, 1
        %s295 = smul.addr %s294, 8
        %s296 = scalar_lea.vmem [#allocation2], %s295
        %p297 = scmp.lt.s32.totalorder %s25, 1
        %s298 = scalar_select %p297, %s25, 1
        %s299 = smul.addr %s298, 8
        %s300 = scalar_lea.vmem %s0, %s299
        %p301 = scmp.lt.s32.totalorder %s26, 0
        %s302 = scalar_select %p301, %s26, 0
        %s303 = smul.addr %s302, 4
        %s304 = scalar_lea.vmem %s1, %s303
        %v306 = vld [vmem:[%s304] sm:$0xf]
        %v307 = vld [vmem:[%s304 + $0x4] sm:$0xf]
        %v308 = vld [vmem:[%s304 + $0x8] sm:$0xf]
        %v309 = vld [vmem:[%s304 + $0xc] sm:$0xf]
        %v310 = vld [vmem:[%s304 + $0x10] sm:$0xf]
        %v311 = vld [vmem:[%s304 + $0x14] sm:$0xf]
        %v312 = vld [vmem:[%s304 + $0x18] sm:$0xf]
        %v313 = vld [vmem:[%s304 + $0x1c] sm:$0xf]
        %v314 = vld [vmem:[%s304 + $0x20] sm:$0xf]
        %v315 = vld [vmem:[%s304 + $0x24] sm:$0xf]
        %v316 = vld [vmem:[%s304 + $0x28] sm:$0xf]
        %v317 = vld [vmem:[%s304 + $0x2c] sm:$0xf]
        %v318 = vld [vmem:[%s304 + $0x30] sm:$0xf]
        %v319 = vld [vmem:[%s304 + $0x34] sm:$0xf]
        %v320 = vld [vmem:[%s304 + $0x38] sm:$0xf]
        %v321 = vld [vmem:[%s304 + $0x3c] sm:$0xf]
        %v322 = vld [vmem:[%s2] sm:$0xff]
        %v323 = vld [vmem:[%s2 + $0x8] sm:$0xff]
        %v324 = vld [vmem:[%s4] sm:$0xf]
        %v325 = vld [vmem:[%s3] sm:$0xff]
        %v326 = vld [vmem:[%s3 + $0x8] sm:$0xff]
        %v327 = vld [vmem:[%s5] sm:$0xff]
        %v328 = vld [vmem:[%s6] sm:$0xff]
        %v329 = vld [vmem:[%s300] sm:$0x1]
        %v330 = vperm.slane %v329, 0
        %v331 = vmul.f32 %v322, %v330
        %v332 = vmul.f32 %v323, %v330
        %v333 = vpack.c.bf16 %v332, %v331
        %335 = vset.pattern.permute.xlu0 0
        %336 = vperm.xlu0 %335, %v325
        %v337 = vpop.permute.xlu0 %336
        %340 = vset.pattern.permute.xlu0 0
        %341 = vperm.xlu0 %340, %v326
        %v342 = vpop.permute.xlu0 %341
        %v360 = vunpack.c.l.b16 %v306
        %v361 = vunpack.c.l.b16 %v307
        %v362 = vunpack.c.l.b16 %v308
        %v363 = vunpack.c.l.b16 %v309
        %v364 = vunpack.c.l.b16 %v310
        %v365 = vunpack.c.l.b16 %v311
        %v366 = vunpack.c.l.b16 %v312
        %v367 = vunpack.c.l.b16 %v313
        %v368 = vunpack.c.l.b16 %v314
        %v369 = vunpack.c.l.b16 %v315
        %v370 = vunpack.c.l.b16 %v316
        %v371 = vunpack.c.l.b16 %v317
        %v372 = vunpack.c.l.b16 %v318
        %v373 = vunpack.c.l.b16 %v319
        %v374 = vunpack.c.l.b16 %v320
        %v375 = vunpack.c.l.b16 %v321
        %v376 = vpack.c.b16 %v361, %v360
        %v377 = vpack.c.b16 %v363, %v362
        %v378 = vpack.c.b16 %v365, %v364
        %v379 = vpack.c.b16 %v367, %v366
        %v380 = vpack.c.b16 %v369, %v368
        %v381 = vpack.c.b16 %v371, %v370
        %v382 = vpack.c.b16 %v373, %v372
        %v383 = vpack.c.b16 %v375, %v374
        %392 = vmatpush.bf16.msra.mxu0 %v383
        %393 = vmatpush.bf16.msra.mxu0 %v382
        %394 = vmatpush.bf16.msra.mxu0 %v381
        %395 = vmatpush.bf16.msra.mxu0 %v380
        %396 = vmatpush.bf16.msra.mxu0 %v379
        %397 = vmatpush.bf16.msra.mxu0 %v378
        %398 = vmatpush.bf16.msra.mxu0 %v377
        %399 = vmatpush.bf16.msra.mxu0 %v376
        %400 = vmatmul.bf16.gmra.mxu0 %v333
        %v401 = vpop.f32.mrf.mxu0
        %v402 = vadd.f32 %v337, %v401
        %v403 = vpop.f32.mrf.mxu0
        %v404 = vadd.f32 %v342, %v403
        %405 = vdwg.mxu0
        %v406 = vmax.f32 %v402, 0.0
        %v407 = vmax.f32 %v404, 0.0
        %v408 = vpack.c.bf16 %v407, %v406
        %410 = vset.pattern.permute.xlu0 0
        %411 = vperm.xlu0 %410, %v327
        %v412 = vpop.permute.xlu0 %411
        %vm414 = vcmask 130048
        %v416 = vsel %vm414, %v324, 0
        %418 = vmatpush.bf16.msra.mxu0 0
        %419 = vmatpush.bf16.msra.mxu0 0
        %420 = vmatpush.bf16.msra.mxu0 0
        %421 = vmatpush.bf16.msra.mxu0 0
        %422 = vmatpush.bf16.msra.mxu0 0
        %423 = vmatpush.bf16.msra.mxu0 0
        %424 = vmatpush.bf16.msra.mxu0 0
        %425 = vmatpush.bf16.msra.mxu0 %v408
        %426 = vmatmul.bf16.gmra.mxu0 %v416
        %v427 = vpop.f32.mrf.mxu0
        %v428 = vadd.f32 %v412, %v427
        %v429 = vpop.f32.mrf.mxu0
        %430 = vdwg.mxu0
        %v431 = vmax.f32 %v428, 0.0
        %433 = vset.pattern.permute.xlu0 0
        %434 = vperm.xlu0 %433, %v328
        %v435 = vpop.permute.xlu0 %434
        %v437 = vmul.f32 %v431, %v435
        %v438 = vrot.slane %v437, 4
        %v439 = vadd.f32 %v437, %v438
        %v440 = vrot.slane %v439, 2
        %v441 = vadd.f32 %v439, %v440
        %v442 = vrot.slane %v441, 1
        %v443 = vadd.f32 %v441, %v442
        %v444 = vsub.f32 0.0, %v443
        %v445 = vmul.f32 %v444, 1.442695
        %v446 = vpow.pop %v445
        %v447 = vadd.f32 %v446, 1.0
        %v448 = vrcp.pop %v447
        %449 = vst [vmem:[%s296] sm:$0x1] %v448
        %v450 = vld [vmem:[%s300 + $0x1] sm:$0x1]
        %v451 = vperm.slane %v450, 0
        %v452 = vmul.f32 %v322, %v451
        %v453 = vmul.f32 %v323, %v451
        %v454 = vpack.c.bf16 %v453, %v452
        %455 = vmatpush.bf16.msra.mxu0 %v383
        %456 = vmatpush.bf16.msra.mxu0 %v382
        %457 = vmatpush.bf16.msra.mxu0 %v381
        %458 = vmatpush.bf16.msra.mxu0 %v380
        %459 = vmatpush.bf16.msra.mxu0 %v379
        %460 = vmatpush.bf16.msra.mxu0 %v378
        %461 = vmatpush.bf16.msra.mxu0 %v377
        %462 = vmatpush.bf16.msra.mxu0 %v376
        %463 = vmatmul.bf16.gmra.mxu0 %v454
        %v464 = vpop.f32.mrf.mxu0
        %v465 = vadd.f32 %v337, %v464
        %v466 = vpop.f32.mrf.mxu0
        %v467 = vadd.f32 %v342, %v466
        %468 = vdwg.mxu0
        %v469 = vmax.f32 %v465, 0.0
        %v470 = vmax.f32 %v467, 0.0
        %v471 = vpack.c.bf16 %v470, %v469
        %472 = vmatpush.bf16.msra.mxu0 0
        %473 = vmatpush.bf16.msra.mxu0 0
        %474 = vmatpush.bf16.msra.mxu0 0
        %475 = vmatpush.bf16.msra.mxu0 0
        %476 = vmatpush.bf16.msra.mxu0 0
        %477 = vmatpush.bf16.msra.mxu0 0
        %478 = vmatpush.bf16.msra.mxu0 0
        %479 = vmatpush.bf16.msra.mxu0 %v471
        %480 = vmatmul.bf16.gmra.mxu0 %v416
        %v481 = vpop.f32.mrf.mxu0
        %v482 = vadd.f32 %v412, %v481
        %v483 = vpop.f32.mrf.mxu0
        %484 = vdwg.mxu0
        %v485 = vmax.f32 %v482, 0.0
        %v486 = vmul.f32 %v485, %v435
        %v487 = vrot.slane %v486, 4
        %v488 = vadd.f32 %v486, %v487
        %v489 = vrot.slane %v488, 2
        %v490 = vadd.f32 %v488, %v489
        %v491 = vrot.slane %v490, 1
        %v492 = vadd.f32 %v490, %v491
        %v493 = vsub.f32 0.0, %v492
        %v494 = vmul.f32 %v493, 1.442695
        %v495 = vpow.pop %v494
        %v496 = vadd.f32 %v495, 1.0
        %v497 = vrcp.pop %v496
        %498 = vst [vmem:[%s296 + $0x1] sm:$0x1] %v497
        %v499 = vld [vmem:[%s300 + $0x2] sm:$0x1]
        %v500 = vperm.slane %v499, 0
        %v501 = vmul.f32 %v322, %v500
        %v502 = vmul.f32 %v323, %v500
        %v503 = vpack.c.bf16 %v502, %v501
        %504 = vmatpush.bf16.msra.mxu0 %v383
        %505 = vmatpush.bf16.msra.mxu0 %v382
        %506 = vmatpush.bf16.msra.mxu0 %v381
        %507 = vmatpush.bf16.msra.mxu0 %v380
        %508 = vmatpush.bf16.msra.mxu0 %v379
        %509 = vmatpush.bf16.msra.mxu0 %v378
        %510 = vmatpush.bf16.msra.mxu0 %v377
        %511 = vmatpush.bf16.msra.mxu0 %v376
        %512 = vmatmul.bf16.gmra.mxu0 %v503
        %v513 = vpop.f32.mrf.mxu0
        %v514 = vadd.f32 %v337, %v513
        %v515 = vpop.f32.mrf.mxu0
        %v516 = vadd.f32 %v342, %v515
        %517 = vdwg.mxu0
        %v518 = vmax.f32 %v514, 0.0
        %v519 = vmax.f32 %v516, 0.0
        %v520 = vpack.c.bf16 %v519, %v518
        %521 = vmatpush.bf16.msra.mxu0 0
        %522 = vmatpush.bf16.msra.mxu0 0
        %523 = vmatpush.bf16.msra.mxu0 0
        %524 = vmatpush.bf16.msra.mxu0 0
        %525 = vmatpush.bf16.msra.mxu0 0
        %526 = vmatpush.bf16.msra.mxu0 0
        %527 = vmatpush.bf16.msra.mxu0 0
        %528 = vmatpush.bf16.msra.mxu0 %v520
        %529 = vmatmul.bf16.gmra.mxu0 %v416
        %v530 = vpop.f32.mrf.mxu0
        %v531 = vadd.f32 %v412, %v530
        %v532 = vpop.f32.mrf.mxu0
        %533 = vdwg.mxu0
        %v534 = vmax.f32 %v531, 0.0
        %v535 = vmul.f32 %v534, %v435
        %v536 = vrot.slane %v535, 4
        %v537 = vadd.f32 %v535, %v536
        %v538 = vrot.slane %v537, 2
        %v539 = vadd.f32 %v537, %v538
        %v540 = vrot.slane %v539, 1
        %v541 = vadd.f32 %v539, %v540
        %v542 = vsub.f32 0.0, %v541
        %v543 = vmul.f32 %v542, 1.442695
        %v544 = vpow.pop %v543
        %v545 = vadd.f32 %v544, 1.0
        %v546 = vrcp.pop %v545
        %547 = vst [vmem:[%s296 + $0x2] sm:$0x1] %v546
        %v548 = vld [vmem:[%s300 + $0x3] sm:$0x1]
        %v549 = vperm.slane %v548, 0
        %v550 = vmul.f32 %v322, %v549
        %v551 = vmul.f32 %v323, %v549
        %v552 = vpack.c.bf16 %v551, %v550
        %553 = vmatpush.bf16.msra.mxu0 %v383
        %554 = vmatpush.bf16.msra.mxu0 %v382
        %555 = vmatpush.bf16.msra.mxu0 %v381
        %556 = vmatpush.bf16.msra.mxu0 %v380
        %557 = vmatpush.bf16.msra.mxu0 %v379
        %558 = vmatpush.bf16.msra.mxu0 %v378
        %559 = vmatpush.bf16.msra.mxu0 %v377
        %560 = vmatpush.bf16.msra.mxu0 %v376
        %561 = vmatmul.bf16.gmra.mxu0 %v552
        %v562 = vpop.f32.mrf.mxu0
        %v563 = vadd.f32 %v337, %v562
        %v564 = vpop.f32.mrf.mxu0
        %v565 = vadd.f32 %v342, %v564
        %566 = vdwg.mxu0
        %v567 = vmax.f32 %v563, 0.0
        %v568 = vmax.f32 %v565, 0.0
        %v569 = vpack.c.bf16 %v568, %v567
        %570 = vmatpush.bf16.msra.mxu0 0
        %571 = vmatpush.bf16.msra.mxu0 0
        %572 = vmatpush.bf16.msra.mxu0 0
        %573 = vmatpush.bf16.msra.mxu0 0
        %574 = vmatpush.bf16.msra.mxu0 0
        %575 = vmatpush.bf16.msra.mxu0 0
        %576 = vmatpush.bf16.msra.mxu0 0
        %577 = vmatpush.bf16.msra.mxu0 %v569
        %578 = vmatmul.bf16.gmra.mxu0 %v416
        %v579 = vpop.f32.mrf.mxu0
        %v580 = vadd.f32 %v412, %v579
        %v581 = vpop.f32.mrf.mxu0
        %582 = vdwg.mxu0
        %v583 = vmax.f32 %v580, 0.0
        %v584 = vmul.f32 %v583, %v435
        %v585 = vrot.slane %v584, 4
        %v586 = vadd.f32 %v584, %v585
        %v587 = vrot.slane %v586, 2
        %v588 = vadd.f32 %v586, %v587
        %v589 = vrot.slane %v588, 1
        %v590 = vadd.f32 %v588, %v589
        %v591 = vsub.f32 0.0, %v590
        %v592 = vmul.f32 %v591, 1.442695
        %v593 = vpow.pop %v592
        %v594 = vadd.f32 %v593, 1.0
        %v595 = vrcp.pop %v594
        %596 = vst [vmem:[%s296 + $0x3] sm:$0x1] %v595
        %v597 = vld [vmem:[%s300 + $0x4] sm:$0x1]
        %v598 = vperm.slane %v597, 0
        %v599 = vmul.f32 %v322, %v598
        %v600 = vmul.f32 %v323, %v598
        %v601 = vpack.c.bf16 %v600, %v599
        %602 = vmatpush.bf16.msra.mxu0 %v383
        %603 = vmatpush.bf16.msra.mxu0 %v382
        %604 = vmatpush.bf16.msra.mxu0 %v381
        %605 = vmatpush.bf16.msra.mxu0 %v380
        %606 = vmatpush.bf16.msra.mxu0 %v379
        %607 = vmatpush.bf16.msra.mxu0 %v378
        %608 = vmatpush.bf16.msra.mxu0 %v377
        %609 = vmatpush.bf16.msra.mxu0 %v376
        %610 = vmatmul.bf16.gmra.mxu0 %v601
        %v611 = vpop.f32.mrf.mxu0
        %v612 = vadd.f32 %v337, %v611
        %v613 = vpop.f32.mrf.mxu0
        %v614 = vadd.f32 %v342, %v613
        %615 = vdwg.mxu0
        %v616 = vmax.f32 %v612, 0.0
        %v617 = vmax.f32 %v614, 0.0
        %v618 = vpack.c.bf16 %v617, %v616
        %619 = vmatpush.bf16.msra.mxu0 0
        %620 = vmatpush.bf16.msra.mxu0 0
        %621 = vmatpush.bf16.msra.mxu0 0
        %622 = vmatpush.bf16.msra.mxu0 0
        %623 = vmatpush.bf16.msra.mxu0 0
        %624 = vmatpush.bf16.msra.mxu0 0
        %625 = vmatpush.bf16.msra.mxu0 0
        %626 = vmatpush.bf16.msra.mxu0 %v618
        %627 = vmatmul.bf16.gmra.mxu0 %v416
        %v628 = vpop.f32.mrf.mxu0
        %v629 = vadd.f32 %v412, %v628
        %v630 = vpop.f32.mrf.mxu0
        %631 = vdwg.mxu0
        %v632 = vmax.f32 %v629, 0.0
        %v633 = vmul.f32 %v632, %v435
        %v634 = vrot.slane %v633, 4
        %v635 = vadd.f32 %v633, %v634
        %v636 = vrot.slane %v635, 2
        %v637 = vadd.f32 %v635, %v636
        %v638 = vrot.slane %v637, 1
        %v639 = vadd.f32 %v637, %v638
        %v640 = vsub.f32 0.0, %v639
        %v641 = vmul.f32 %v640, 1.442695
        %v642 = vpow.pop %v641
        %v643 = vadd.f32 %v642, 1.0
        %v644 = vrcp.pop %v643
        %645 = vst [vmem:[%s296 + $0x4] sm:$0x1] %v644
        %v646 = vld [vmem:[%s300 + $0x5] sm:$0x1]
        %v647 = vperm.slane %v646, 0
        %v648 = vmul.f32 %v322, %v647
        %v649 = vmul.f32 %v323, %v647
        %v650 = vpack.c.bf16 %v649, %v648
        %651 = vmatpush.bf16.msra.mxu0 %v383
        %652 = vmatpush.bf16.msra.mxu0 %v382
        %653 = vmatpush.bf16.msra.mxu0 %v381
        %654 = vmatpush.bf16.msra.mxu0 %v380
        %655 = vmatpush.bf16.msra.mxu0 %v379
        %656 = vmatpush.bf16.msra.mxu0 %v378
        %657 = vmatpush.bf16.msra.mxu0 %v377
        %658 = vmatpush.bf16.msra.mxu0 %v376
        %659 = vmatmul.bf16.gmra.mxu0 %v650
        %v660 = vpop.f32.mrf.mxu0
        %v661 = vadd.f32 %v337, %v660
        %v662 = vpop.f32.mrf.mxu0
        %v663 = vadd.f32 %v342, %v662
        %664 = vdwg.mxu0
        %v665 = vmax.f32 %v661, 0.0
        %v666 = vmax.f32 %v663, 0.0
        %v667 = vpack.c.bf16 %v666, %v665
        %668 = vmatpush.bf16.msra.mxu0 0
        %669 = vmatpush.bf16.msra.mxu0 0
        %670 = vmatpush.bf16.msra.mxu0 0
        %671 = vmatpush.bf16.msra.mxu0 0
        %672 = vmatpush.bf16.msra.mxu0 0
        %673 = vmatpush.bf16.msra.mxu0 0
        %674 = vmatpush.bf16.msra.mxu0 0
        %675 = vmatpush.bf16.msra.mxu0 %v667
        %676 = vmatmul.bf16.gmra.mxu0 %v416
        %v677 = vpop.f32.mrf.mxu0
        %v678 = vadd.f32 %v412, %v677
        %v679 = vpop.f32.mrf.mxu0
        %680 = vdwg.mxu0
        %v681 = vmax.f32 %v678, 0.0
        %v682 = vmul.f32 %v681, %v435
        %v683 = vrot.slane %v682, 4
        %v684 = vadd.f32 %v682, %v683
        %v685 = vrot.slane %v684, 2
        %v686 = vadd.f32 %v684, %v685
        %v687 = vrot.slane %v686, 1
        %v688 = vadd.f32 %v686, %v687
        %v689 = vsub.f32 0.0, %v688
        %v690 = vmul.f32 %v689, 1.442695
        %v691 = vpow.pop %v690
        %v692 = vadd.f32 %v691, 1.0
        %v693 = vrcp.pop %v692
        %694 = vst [vmem:[%s296 + $0x5] sm:$0x1] %v693
        %v695 = vld [vmem:[%s300 + $0x6] sm:$0x1]
        %v696 = vperm.slane %v695, 0
        %v697 = vmul.f32 %v322, %v696
        %v698 = vmul.f32 %v323, %v696
        %v699 = vpack.c.bf16 %v698, %v697
        %700 = vmatpush.bf16.msra.mxu0 %v383
        %701 = vmatpush.bf16.msra.mxu0 %v382
        %702 = vmatpush.bf16.msra.mxu0 %v381
        %703 = vmatpush.bf16.msra.mxu0 %v380
        %704 = vmatpush.bf16.msra.mxu0 %v379
        %705 = vmatpush.bf16.msra.mxu0 %v378
        %706 = vmatpush.bf16.msra.mxu0 %v377
        %707 = vmatpush.bf16.msra.mxu0 %v376
        %708 = vmatmul.bf16.gmra.mxu0 %v699
        %v709 = vpop.f32.mrf.mxu0
        %v710 = vadd.f32 %v337, %v709
        %v711 = vpop.f32.mrf.mxu0
        %v712 = vadd.f32 %v342, %v711
        %713 = vdwg.mxu0
        %v714 = vmax.f32 %v710, 0.0
        %v715 = vmax.f32 %v712, 0.0
        %v716 = vpack.c.bf16 %v715, %v714
        %717 = vmatpush.bf16.msra.mxu0 0
        %718 = vmatpush.bf16.msra.mxu0 0
        %719 = vmatpush.bf16.msra.mxu0 0
        %720 = vmatpush.bf16.msra.mxu0 0
        %721 = vmatpush.bf16.msra.mxu0 0
        %722 = vmatpush.bf16.msra.mxu0 0
        %723 = vmatpush.bf16.msra.mxu0 0
        %724 = vmatpush.bf16.msra.mxu0 %v716
        %725 = vmatmul.bf16.gmra.mxu0 %v416
        %v726 = vpop.f32.mrf.mxu0
        %v727 = vadd.f32 %v412, %v726
        %v728 = vpop.f32.mrf.mxu0
        %729 = vdwg.mxu0
        %v730 = vmax.f32 %v727, 0.0
        %v731 = vmul.f32 %v730, %v435
        %v732 = vrot.slane %v731, 4
        %v733 = vadd.f32 %v731, %v732
        %v734 = vrot.slane %v733, 2
        %v735 = vadd.f32 %v733, %v734
        %v736 = vrot.slane %v735, 1
        %v737 = vadd.f32 %v735, %v736
        %v738 = vsub.f32 0.0, %v737
        %v739 = vmul.f32 %v738, 1.442695
        %v740 = vpow.pop %v739
        %v741 = vadd.f32 %v740, 1.0
        %v742 = vrcp.pop %v741
        %743 = vst [vmem:[%s296 + $0x6] sm:$0x1] %v742
        %v744 = vld [vmem:[%s300 + $0x7] sm:$0x1]
        %v745 = vperm.slane %v744, 0
        %v746 = vmul.f32 %v322, %v745
        %v747 = vmul.f32 %v323, %v745
        %v748 = vpack.c.bf16 %v747, %v746
        %749 = vmatpush.bf16.msra.mxu0 %v383
        %750 = vmatpush.bf16.msra.mxu0 %v382
        %751 = vmatpush.bf16.msra.mxu0 %v381
        %752 = vmatpush.bf16.msra.mxu0 %v380
        %753 = vmatpush.bf16.msra.mxu0 %v379
        %754 = vmatpush.bf16.msra.mxu0 %v378
        %755 = vmatpush.bf16.msra.mxu0 %v377
        %756 = vmatpush.bf16.msra.mxu0 %v376
        %757 = vmatmul.bf16.gmra.mxu0 %v748
        %v758 = vpop.f32.mrf.mxu0
        %v759 = vadd.f32 %v337, %v758
        %v760 = vpop.f32.mrf.mxu0
        %v761 = vadd.f32 %v342, %v760
        %762 = vdwg.mxu0
        %v763 = vmax.f32 %v759, 0.0
        %v764 = vmax.f32 %v761, 0.0
        %v765 = vpack.c.bf16 %v764, %v763
        %766 = vmatpush.bf16.msra.mxu0 0
        %767 = vmatpush.bf16.msra.mxu0 0
        %768 = vmatpush.bf16.msra.mxu0 0
        %769 = vmatpush.bf16.msra.mxu0 0
        %770 = vmatpush.bf16.msra.mxu0 0
        %771 = vmatpush.bf16.msra.mxu0 0
        %772 = vmatpush.bf16.msra.mxu0 0
        %773 = vmatpush.bf16.msra.mxu0 %v765
        %774 = vmatmul.bf16.gmra.mxu0 %v416
        %v775 = vpop.f32.mrf.mxu0
        %v776 = vadd.f32 %v412, %v775
        %v777 = vpop.f32.mrf.mxu0
        %778 = vdwg.mxu0
        %v779 = vmax.f32 %v776, 0.0
        %v780 = vmul.f32 %v779, %v435
        %v781 = vrot.slane %v780, 4
        %v782 = vadd.f32 %v780, %v781
        %v783 = vrot.slane %v782, 2
        %v784 = vadd.f32 %v782, %v783
        %v785 = vrot.slane %v784, 1
        %v786 = vadd.f32 %v784, %v785
        %v787 = vsub.f32 0.0, %v786
        %v788 = vmul.f32 %v787, 1.442695
        %v789 = vpow.pop %v788
        %v790 = vadd.f32 %v789, 1.0
        %v791 = vrcp.pop %v790
        %792 = vst [vmem:[%s296 + $0x7] sm:$0x1] %v791
        %s793 = sand.u32 %s200, 1
        %s794 = scalar_lea.sflag [#allocation3], %s793
        %s795 = sand.u32 %s200, 1
        %s796 = smul.addr %s795, 8
        %s797 = scalar_lea.vmem [#allocation2], %s796
        // Predicated region
        $region49: #{model_ncacf_forward.3} parent=47 // pred_check
          %p798 = pneg %p210
        $region50: #{model_ncacf_forward.3} parent=47 // pred_check_branch
          %800 = sbr.rel (%p798) target = $region52
        $region51: #{model_ncacf_forward.3} parent=47 // pred_region
          %802 = vsyncadd %s794, 0
          %s803 = sadd.s32 %s26, %s25
          %s804 = smul.addr %s803, 8
          %s805 = scalar_lea.hbm %s7, %s804
          %s807 = sshll.u32 %s797, 4
          %s808 = int_to_ptr.vmem [resolvable:$true] %s807
          %s809 = sshll.u32 %s805, 4
          %s810 = int_to_ptr.hbm [resolvable:$true] %s809
          %812 = dma.vmem_to_hbm [thread:$0]  %s808, 128, %s810, %s794
        $region52: #{model_ncacf_forward.3} parent=47 // pred_fallthru
          _
      $region48: #{model_ncacf_forward.3} parent=5 // pred_fallthru
        _
      %p813 = scmp.le.s32.totalorder 2, %s16
      // Predicated region
      $region53: #{model_ncacf_forward.3} parent=5 // pred_check
        %p814 = pneg %p813
      $region54: #{model_ncacf_forward.3} parent=5 // pred_check_branch
        %816 = sbr.rel (%p814) target = $region56
      $region55: #{model_ncacf_forward.3} parent=5 // pred_region
        %s817 = ssub.s32 %s16, 2
        // Predicated region
        $region57: #{model_ncacf_forward.3} parent=55 // pred_check
          %p818 = pneg %p216
        $region58: #{model_ncacf_forward.3} parent=55 // pred_check_branch
          %820 = sbr.rel (%p818) target = $region60
        $region59: #{model_ncacf_forward.3} parent=55 // pred_region
          %s821 = sand.u32 %s201, 1
          %s822 = scalar_lea.sflag [#allocation3], %s821
          %s823 = sand.u32 %s201, 1
          %s824 = smul.addr %s823, 8
          %s825 = scalar_lea.vmem [#allocation2], %s824
          %827 = dma.done %s822, 128
        $region60: #{model_ncacf_forward.3} parent=55 // pred_fallthru
          _
      $region56: #{model_ncacf_forward.3} parent=5 // pred_fallthru
        _
    $region6: #{model_ncacf_forward.3} parent=1 // loop_footer
      %s20 = sadd.s32 1, %s16
    $region7: #{model_ncacf_forward.3} parent=1 // loop_footer_branch
      %15 = sbr.rel target = $region3
    $region8: #{model_ncacf_forward.3} parent=1 // loop_exit
      _
    %828 = vsyncpa [#allocation3], 1
    %s829 = scalar_lea.sflag [#allocation3], 1
    %830 = vsyncpa %s829, 1

</llo_original>
